<compile_context>
chip_gen: v7x
topology: tpu7x:2x2x1
jax: 0.10.0
libtpu: 0.0.40
codegen_flags: <defaults>
</compile_context>

<pallas_src>
import jax
import jax.numpy as jnp
from jax.experimental import pallas as pl
from jax.experimental.pallas import tpu as pltpu

_INT32_MIN = -2147483648


def _tsc_kernel(mem_n_ref, lu_prev_ref, msg_ref, t_row_ref, assoc_ref,
                w_ih_ref, b_ih_ref, w_hh_ref, b_hh_ref,
                new_mem_ref, last_upd_ref,
                msg_acc, cnt_acc, tmax_acc):
    j = pl.program_id(1)
    n_e = pl.num_programs(1)
    TN = msg_acc.shape[0]
    TE = msg_ref.shape[0]

    # ---- init accumulators at the start of each E-reduction ------------------
    @pl.when(j == 0)
    def _init():
        msg_acc[...] = jnp.zeros_like(msg_acc)
        cnt_acc[...] = jnp.zeros_like(cnt_acc)
        tmax_acc[...] = jnp.full_like(tmax_acc, _INT32_MIN)

    # ---- one-hot scatter matrix built directly in [TN, TE] layout ------------
    n_off = pl.program_id(0) * TN
    rows = jax.lax.broadcasted_iota(jnp.int32, (TN, TE), 0) + n_off
    onehot_b = assoc_ref[...] == rows                                          # [TN, TE]
    onehot = onehot_b.astype(jnp.float32)

    # scatter-add of the concatenated messages (mean-aggregation numerator)
    msg_acc[...] += jnp.dot(onehot, msg_ref[...],
                            preferred_element_type=jnp.float32)               # [TN, D]
    cnt_acc[...] += jnp.sum(onehot, axis=1, keepdims=True)                     # [TN, 1]

    # scatter-max of t (int32 all the way; no float round-trip)
    masked_t = jnp.where(onehot_b, t_row_ref[...], _INT32_MIN)                 # [TN, TE]
    tmax_acc[...] = jnp.maximum(tmax_acc[...],
                                jnp.max(masked_t, axis=1, keepdims=True))

    # ---- finalize: mean, GRU input/hidden transforms, gates, outputs ----------
    @pl.when(j == n_e - 1)
    def _finalize():
        cnt = cnt_acc[...]                                                     # [TN, 1]
        inv_cnt = pl.reciprocal(jnp.maximum(cnt, 1.0), approx=False)
        aggr = msg_acc[...] * inv_cnt                                          # [TN, D]
        h = mem_n_ref[...]                                                     # [TN, H]

        def gi(g):
            return (jnp.dot(aggr, w_ih_ref[g], preferred_element_type=jnp.float32)
                    + b_ih_ref[g])

        def gh(g):
            return (jnp.dot(h, w_hh_ref[g], preferred_element_type=jnp.float32)
                    + b_hh_ref[g])

        r = jax.nn.sigmoid(gi(0) + gh(0))
        z = jax.nn.sigmoid(gi(1) + gh(1))
        n = jnp.tanh(gi(2) + r * gh(2))
        new_mem_ref[...] = ((1.0 - z) * n + z * h).astype(new_mem_ref.dtype)
        # nodes with zero incoming messages keep their previous last_update
        last_upd_ref[...] = jnp.where(cnt > 0.0, tmax_acc[...], lu_prev_ref[...])


def tsc_get_updated_memory(mem_n, lu_prev, mem_src, mem_dst, raw_msg, t_int, t_rel,
                           assoc, w_time_t, b_time, w_ih_t, b_ih, w_hh_t, b_hh,
                           *, tile_n=None, tile_e=256):
    """Fused Pallas kernel for the TGN memory update. Returns (new_memory, last_update)."""
    N, H = mem_n.shape
    E, R = raw_msg.shape
    T = w_time_t.shape[1]
    D = 2 * H + R + T
    assert w_ih_t.shape == (D, 3 * H)

    # --- glue: TimeEncoder + IdentityMessage concat (elementwise / layout only) ----
    t_enc = jnp.cos(t_rel * w_time_t + b_time)                       # [E, T]
    msg = jnp.concatenate([mem_src, mem_dst, raw_msg, t_enc], axis=-1)   # [E, D]

    # --- split weights per gate (leading-axis indexing in-kernel; no mid-vreg slice) ---
    def gate_split(w):                                    # [in, 3H] -> [3, in, H]
        return jnp.stack([w[:, g * H:(g + 1) * H] for g in range(3)], axis=0)

    w_ih_g = gate_split(w_ih_t)                           # [3, D, H]
    w_hh_g = gate_split(w_hh_t)                           # [3, H, H]
    b_ih_g = gate_split(b_ih)                             # [3, 1, H]
    b_hh_g = gate_split(b_hh)                             # [3, 1, H]

    # --- tile sizes / padding --------------------------------------------------------
    if tile_n is None:
        tile_n = min(256, N + (-N) % 8)                   # big MXU-filling node tile
    N_pad = N + (-N) % tile_n
    E_pad = E + (-E) % tile_e

    def pad_rows(x, rows):
        return jnp.pad(x, ((0, rows - x.shape[0]),) + ((0, 0),) * (x.ndim - 1))

    mem_n_p = pad_rows(mem_n, N_pad)
    lu_prev_p = pad_rows(lu_prev.astype(jnp.int32)[:, None], N_pad)
    msg_p = pad_rows(msg, E_pad)
    t_row = jnp.pad(t_int.astype(jnp.int32), (0, E_pad - E))[None, :]
    assoc_row = jnp.pad(assoc.astype(jnp.int32), (0, E_pad - E),
                        constant_values=-1)[None, :]      # -1 never matches a node row

    grid = (N_pad // tile_n, E_pad // tile_e)

    def const_spec(shape):
        nd = len(shape)
        return pl.BlockSpec(shape, lambda i, j, _nd=nd: (0,) * _nd)

    in_specs = [
        pl.BlockSpec((tile_n, H), lambda i, j: (i, 0)),   # mem_n
        pl.BlockSpec((tile_n, 1), lambda i, j: (i, 0)),   # prior last_update
        pl.BlockSpec((tile_e, D), lambda i, j: (j, 0)),   # concatenated messages
        pl.BlockSpec((1, tile_e), lambda i, j: (0, j)),   # t (int32 row)
        pl.BlockSpec((1, tile_e), lambda i, j: (0, j)),   # assoc (int32 row)
        const_spec((3, D, H)),                            # w_ih (per gate)
        const_spec((3, 1, H)),                            # b_ih (per gate)
        const_spec((3, H, H)),                            # w_hh (per gate)
        const_spec((3, 1, H)),                            # b_hh (per gate)
    ]
    out_specs = (
        pl.BlockSpec((tile_n, H), lambda i, j: (i, 0)),
        # TODO(synk): last_update could be emitted as a lane-dense [1, tile_n] row;
        # kept as a (tile_n, 1) column here since it is a tiny output.
        pl.BlockSpec((tile_n, 1), lambda i, j: (i, 0)),
    )
    out_shape = (
        jax.ShapeDtypeStruct((N_pad, H), jnp.float32),
        jax.ShapeDtypeStruct((N_pad, 1), jnp.int32),
    )
    scratch_shapes = [
        pltpu.VMEM((tile_n, D), jnp.float32),   # message-sum accumulator
        pltpu.VMEM((tile_n, 1), jnp.float32),   # counts
        pltpu.VMEM((tile_n, 1), jnp.int32),     # running t max
    ]

    new_mem_p, last_upd_p = pl.pallas_call(
        _tsc_kernel,
        grid=grid,
        in_specs=in_specs,
        out_specs=out_specs,
        out_shape=out_shape,
        scratch_shapes=scratch_shapes,
        compiler_params=pltpu.CompilerParams(
            dimension_semantics=("parallel", "arbitrary"),
            vmem_limit_bytes=64 * 1024 * 1024),
    )(mem_n_p, lu_prev_p, msg_p, t_row, assoc_row, w_ih_g, b_ih_g, w_hh_g, b_hh_g)

    return new_mem_p[:N], last_upd_p[:N, 0]


def _ref_get_updated_memory(mem_n, lu_prev, mem_src, mem_dst, raw_msg, t_rel, t_all,
                            assoc, w_time_t, b_time, w_ih_t, b_ih, w_hh_t, b_hh):
    """Pure-JAX reference of the same math (for correctness check)."""
    N, H = mem_n.shape
    t_enc = jnp.cos(t_rel @ w_time_t + b_time)
    msg = jnp.concatenate([mem_src, mem_dst, raw_msg, t_enc], axis=-1)
    onehot = (assoc[:, None] == jnp.arange(N)[None, :]).astype(jnp.float32)
    counts = onehot.sum(0)
    aggr = (onehot.T @ msg) / jnp.maximum(counts, 1.0)[:, None]
    gi = aggr @ w_ih_t + b_ih
    gh = mem_n @ w_hh_t + b_hh
    r = jax.nn.sigmoid(gi[:, :H] + gh[:, :H])
    z = jax.nn.sigmoid(gi[:, H:2 * H] + gh[:, H:2 * H])
    nn_ = jnp.tanh(gi[:, 2 * H:] + r * gh[:, 2 * H:])
    new_mem = (1.0 - z) * nn_ + z * mem_n
    masked = jnp.where(onehot > 0, t_all[:, None], _INT32_MIN)     # [E, N] int32
    lu = jnp.where(counts > 0, masked.max(0), lu_prev).astype(jnp.int32)
    return new_mem, lu


if __name__ == "__main__":
    key = jax.random.PRNGKey(0)
    num_nodes = 16
    memory_dim = 32
    raw_msg_dim = 16
    time_dim = 8
    num_events = 80          # -> 160 directed message events (both directions)
    msg_dim = 2 * memory_dim + raw_msg_dim + time_dim   # IdentityMessage.out_channels

    keys = jax.random.split(key, 12)

    # reset_state(): memory = node_features.clone(); last_update = 0
    node_features = jax.random.normal(keys[0], (num_nodes, memory_dim), jnp.float32)
    memory = node_features
    last_update = jnp.zeros((num_nodes,), jnp.int32)

    # Synthetic batch of temporal-graph events (contents of msg_s_store / msg_d_store).
    src = jax.random.randint(keys[1], (num_events,), 0, num_nodes)
    dst = jax.random.randint(keys[2], (num_events,), 0, num_nodes)
    t_ev = jax.random.randint(keys[3], (num_events,), 1, 100)
    raw = jax.random.normal(keys[4], (num_events, raw_msg_dim), jnp.float32)

    # n_id = cat([src, dst]).unique()   (glue; dynamic-shape host-side op)
    n_id = jnp.unique(jnp.concatenate([src, dst]))
    N = int(n_id.shape[0])

    # Source-direction messages then destination-direction messages (msg_s / msg_d).
    src_all = jnp.concatenate([src, dst])
    dst_all = jnp.concatenate([dst, src])
    t_all_i = jnp.concatenate([t_ev, t_ev]).astype(jnp.int32)
    raw_all = jnp.concatenate([raw, raw], axis=0)
    assoc = jnp.searchsorted(n_id, src_all).astype(jnp.int32)   # _assoc[idx]

    # Gathers (glue): memory[n_id], last_update[n_id], memory[src], memory[dst], t_rel
    mem_n = memory[n_id]
    lu_prev = last_update[n_id]
    mem_src = memory[src_all]
    mem_dst = memory[dst_all]
    t_rel = (t_all_i.astype(jnp.float32)
             - last_update[src_all].astype(jnp.float32))[:, None]   # [E, 1]

    # Deterministic parameter init (PyTorch-style uniform(-1/sqrt(fan_in), +)).
    def uniform(k, shape, bound):
        return jax.random.uniform(k, shape, jnp.float32, -bound, bound)

    w_time_t = uniform(keys[5], (1, time_dim), 1.0)          # Linear(1, time_dim).weight^T
    b_time = uniform(keys[6], (1, time_dim), 1.0)
    gb = 1.0 / float(memory_dim) ** 0.5
    w_ih_t = uniform(keys[7], (msg_dim, 3 * memory_dim), gb)  # GRUCell.weight_ih^T
    b_ih = uniform(keys[8], (1, 3 * memory_dim), gb)
    w_hh_t = uniform(keys[9], (memory_dim, 3 * memory_dim), gb)
    b_hh = uniform(keys[10], (1, 3 * memory_dim), gb)

    new_mem, new_last_update = tsc_get_updated_memory(
        mem_n, lu_prev, mem_src, mem_dst, raw_all, t_all_i, t_rel, assoc,
        w_time_t, b_time, w_ih_t, b_ih, w_hh_t, b_hh,
        tile_e=256)
    jax.block_until_ready(new_mem)
    jax.block_until_ready(new_last_update)

    ref_mem, ref_lu = _ref_get_updated_memory(
        mem_n, lu_prev, mem_src, mem_dst, raw_all, t_rel, t_all_i, assoc,
        w_time_t, b_time, w_ih_t, b_ih, w_hh_t, b_hh)

    assert new_mem.shape == (N, memory_dim)
    assert new_last_update.shape == (N,)
    assert jnp.allclose(new_mem, ref_mem, atol=1e-4, rtol=1e-4)
    assert jnp.array_equal(new_last_update, ref_lu)

    print("KERNEL_OK")
</pallas_src>

<mosaic_0001>
module attributes {stable_mosaic.version = 11 : i64} {
  func.func @_tsc_kernel(%arg0: i32, %arg1: i32, %arg2: memref<16x32xf32, #tpu.memory_space<vmem>>, %arg3: memref<16x1xi32, #tpu.memory_space<vmem>>, %arg4: memref<256x88xf32, #tpu.memory_space<vmem>>, %arg5: memref<1x256xi32, #tpu.memory_space<vmem>>, %arg6: memref<1x256xi32, #tpu.memory_space<vmem>>, %arg7: memref<3x88x32xf32, #tpu.memory_space<vmem>>, %arg8: memref<3x1x32xf32, #tpu.memory_space<vmem>>, %arg9: memref<3x32x32xf32, #tpu.memory_space<vmem>>, %arg10: memref<3x1x32xf32, #tpu.memory_space<vmem>>, %arg11: memref<16x32xf32, #tpu.memory_space<vmem>>, %arg12: memref<16x1xi32, #tpu.memory_space<vmem>>, %arg13: memref<16x88xf32, #tpu.memory_space<vmem>>, %arg14: memref<16x1xf32, #tpu.memory_space<vmem>>, %arg15: memref<16x1xi32, #tpu.memory_space<vmem>>) attributes {dimension_semantics = [#tpu.dimension_semantics<parallel>, #tpu.dimension_semantics<arbitrary>], iteration_bounds = array<i64: 1, 1>, scalar_prefetch = 0 : i64, scratch_operands = 3 : i64, tpu.core_type = #tpu.core_type<tc>, window_params = [{transform_indices = @transform_0, window_bounds = array<i64: 16, 32>}, {transform_indices = @transform_1, window_bounds = array<i64: 16, 1>}, {transform_indices = @transform_2, window_bounds = array<i64: 256, 88>}, {transform_indices = @transform_3, window_bounds = array<i64: 1, 256>}, {transform_indices = @transform_4, window_bounds = array<i64: 1, 256>}, {pipeline_mode = #tpu.pipeline_mode<synchronous>, transform_indices = @transform_5, window_bounds = array<i64: 3, 88, 32>}, {pipeline_mode = #tpu.pipeline_mode<synchronous>, transform_indices = @transform_6, window_bounds = array<i64: 3, 1, 32>}, {pipeline_mode = #tpu.pipeline_mode<synchronous>, transform_indices = @transform_7, window_bounds = array<i64: 3, 32, 32>}, {pipeline_mode = #tpu.pipeline_mode<synchronous>, transform_indices = @transform_8, window_bounds = array<i64: 3, 1, 32>}, {transform_indices = @transform_9, window_bounds = array<i64: 16, 32>}, {transform_indices = @transform_10, window_bounds = array<i64: 16, 1>}]} {
    %c0_i32 = arith.constant 0 : i32
    %0 = arith.cmpi eq, %arg1, %c0_i32 : i32
    %1 = arith.extui %0 : i1 to i32
    %c0_i32_0 = arith.constant 0 : i32
    %2 = arith.cmpi ne, %1, %c0_i32_0 : i32
    scf.if %2 {
      %cst_22 = arith.constant 0.000000e+00 : f32
      %35 = vector.broadcast %cst_22 : f32 to vector<16x88xf32>
      %c0_23 = arith.constant 0 : index
      %c0_24 = arith.constant 0 : index
      %36 = vector.load %arg13[%c0_23, %c0_24] : memref<16x88xf32, #tpu.memory_space<vmem>>, vector<16x88xf32>
      tpu.vector_store %arg13[%c0_23, %c0_24], %35 {strides = array<i32>} : memref<16x88xf32, #tpu.memory_space<vmem>>, vector<16x88xf32>,
      %cst_25 = arith.constant 0.000000e+00 : f32
      %37 = vector.broadcast %cst_25 : f32 to vector<16x1xf32>
      %c0_26 = arith.constant 0 : index
      %c0_27 = arith.constant 0 : index
      %38 = vector.load %arg14[%c0_26, %c0_27] : memref<16x1xf32, #tpu.memory_space<vmem>>, vector<16x1xf32>
      tpu.vector_store %arg14[%c0_26, %c0_27], %37 {strides = array<i32>} : memref<16x1xf32, #tpu.memory_space<vmem>>, vector<16x1xf32>,
      %c-2147483648_i32_28 = arith.constant -2147483648 : i32
      %39 = vector.broadcast %c-2147483648_i32_28 : i32 to vector<16x1xi32>
      %c0_29 = arith.constant 0 : index
      %c0_30 = arith.constant 0 : index
      %40 = vector.load %arg15[%c0_29, %c0_30] : memref<16x1xi32, #tpu.memory_space<vmem>>, vector<16x1xi32>
      tpu.vector_store %arg15[%c0_29, %c0_30], %39 {strides = array<i32>} : memref<16x1xi32, #tpu.memory_space<vmem>>, vector<16x1xi32>,
    } else {
    }
    %c16_i32 = arith.constant 16 : i32
    %3 = arith.muli %arg0, %c16_i32 : i32
    %4 = tpu.iota {dimensions = array<i32: 0>} : vector<16x256xi32>
    %5 = vector.broadcast %3 : i32 to vector<16x256xi32>
    %6 = arith.addi %4, %5 : vector<16x256xi32>
    %c0 = arith.constant 0 : index
    %c0_1 = arith.constant 0 : index
    %7 = vector.load %arg6[%c0, %c0_1] : memref<1x256xi32, #tpu.memory_space<vmem>>, vector<1x256xi32>
    %8 = vector.broadcast %7 : vector<1x256xi32> to vector<16x256xi32>
    %9 = arith.cmpi eq, %8, %6 : vector<16x256xi32>
    %10 = arith.extui %9 : vector<16x256xi1> to vector<16x256xi32>
    %11 = arith.sitofp %10 : vector<16x256xi32> to vector<16x256xf32>
    %c0_2 = arith.constant 0 : index
    %c0_3 = arith.constant 0 : index
    %12 = vector.load %arg13[%c0_2, %c0_3] : memref<16x88xf32, #tpu.memory_space<vmem>>, vector<16x88xf32>
    %c0_4 = arith.constant 0 : index
    %c0_5 = arith.constant 0 : index
    %13 = vector.load %arg4[%c0_4, %c0_5] : memref<256x88xf32, #tpu.memory_space<vmem>>, vector<256x88xf32>
    %cst = arith.constant dense<0.000000e+00> : vector<16x88xf32>
    %14 = tpu.matmul %11, %13, %cst {dimension_numbers = #tpu.dot_dimension_numbers<[1], [0], [0], [1], [0, 0, 1, 1], [], []>} : vector<16x256xf32>, vector<256x88xf32>, vector<16x88xf32> -> vector<16x88xf32>
    %15 = arith.addf %12, %14 : vector<16x88xf32>
    %c0_6 = arith.constant 0 : index
    %c0_7 = arith.constant 0 : index
    %16 = vector.load %arg13[%c0_6, %c0_7] : memref<16x88xf32, #tpu.memory_space<vmem>>, vector<16x88xf32>
    tpu.vector_store %arg13[%c0_6, %c0_7], %15 {strides = array<i32>} : memref<16x88xf32, #tpu.memory_space<vmem>>, vector<16x88xf32>,
    %c0_8 = arith.constant 0 : index
    %c0_9 = arith.constant 0 : index
    %17 = vector.load %arg14[%c0_8, %c0_9] : memref<16x1xf32, #tpu.memory_space<vmem>>, vector<16x1xf32>
    %cst_10 = arith.constant dense<0.000000e+00> : vector<16xf32>
    %18 = vector.multi_reduction <add>, %11, %cst_10 [1] : vector<16x256xf32> to vector<16xf32>
    %19 = vector.shape_cast %18 : vector<16xf32> to vector<16x1xf32>
    %20 = arith.addf %17, %19 : vector<16x1xf32>
    %c0_11 = arith.constant 0 : index
    %c0_12 = arith.constant 0 : index
    %21 = vector.load %arg14[%c0_11, %c0_12] : memref<16x1xf32, #tpu.memory_space<vmem>>, vector<16x1xf32>
    tpu.vector_store %arg14[%c0_11, %c0_12], %20 {strides = array<i32>} : memref<16x1xf32, #tpu.memory_space<vmem>>, vector<16x1xf32>,
    %c0_13 = arith.constant 0 : index
    %c0_14 = arith.constant 0 : index
    %22 = vector.load %arg5[%c0_13, %c0_14] : memref<1x256xi32, #tpu.memory_space<vmem>>, vector<1x256xi32>
    %c-2147483648_i32 = arith.constant -2147483648 : i32
    %23 = vector.shape_cast %22 : vector<1x256xi32> to vector<1x256xi32>
    %24 = vector.broadcast %23 : vector<1x256xi32> to vector<16x256xi32>
    %25 = vector.broadcast %c-2147483648_i32 : i32 to vector<16x256xi32>
    %26 = arith.select %9, %24, %25 : vector<16x256xi1>, vector<16x256xi32>
    %c0_15 = arith.constant 0 : index
    %c0_16 = arith.constant 0 : index
    %27 = vector.load %arg15[%c0_15, %c0_16] : memref<16x1xi32, #tpu.memory_space<vmem>>, vector<16x1xi32>
    %cst_17 = arith.constant dense<-2147483648> : vector<16xi32>
    %28 = vector.multi_reduction <maxsi>, %26, %cst_17 [1] : vector<16x256xi32> to vector<16xi32>
    %29 = vector.shape_cast %28 : vector<16xi32> to vector<16x1xi32>
    %30 = arith.maxsi %27, %29 : vector<16x1xi32>
    %c0_18 = arith.constant 0 : index
    %c0_19 = arith.constant 0 : index
    %31 = vector.load %arg15[%c0_18, %c0_19] : memref<16x1xi32, #tpu.memory_space<vmem>>, vector<16x1xi32>
    tpu.vector_store %arg15[%c0_18, %c0_19], %30 {strides = array<i32>} : memref<16x1xi32, #tpu.memory_space<vmem>>, vector<16x1xi32>,
    %c0_i32_20 = arith.constant 0 : i32
    %32 = arith.cmpi eq, %arg1, %c0_i32_20 : i32
    %33 = arith.extui %32 : i1 to i32
    %c0_i32_21 = arith.constant 0 : i32
    %34 = arith.cmpi ne, %33, %c0_i32_21 : i32
    scf.if %34 {
      %c0_22 = arith.constant 0 : index
      %c0_23 = arith.constant 0 : index
      %35 = vector.load %arg14[%c0_22, %c0_23] : memref<16x1xf32, #tpu.memory_space<vmem>>, vector<16x1xf32>
      %cst_24 = arith.constant 1.000000e+00 : f32
      %36 = vector.broadcast %cst_24 : f32 to vector<16x1xf32>
      %37 = arith.maximumf %35, %36 : vector<16x1xf32>
      %38 = tpu.reciprocal %37 : vector<16x1xf32> -> vector<16x1xf32>
      %c0_25 = arith.constant 0 : index
      %c0_26 = arith.constant 0 : index
      %39 = vector.load %arg13[%c0_25, %c0_26] : memref<16x88xf32, #tpu.memory_space<vmem>>, vector<16x88xf32>
      %40 = vector.broadcast %38 : vector<16x1xf32> to vector<16x88xf32>
      %41 = arith.mulf %39, %40 : vector<16x88xf32>
      %c0_27 = arith.constant 0 : index
      %c0_28 = arith.constant 0 : index
      %42 = vector.load %arg2[%c0_27, %c0_28] : memref<16x32xf32, #tpu.memory_space<vmem>>, vector<16x32xf32>
      %c0_29 = arith.constant 0 : index
      %c0_30 = arith.constant 0 : index
      %c0_31 = arith.constant 0 : index
      %43 = vector.load %arg7[%c0_29, %c0_30, %c0_31] : memref<3x88x32xf32, #tpu.memory_space<vmem>>, vector<1x88x32xf32>
      %44 = vector.shape_cast %43 : vector<1x88x32xf32> to vector<88x32xf32>
      %cst_32 = arith.constant dense<0.000000e+00> : vector<16x32xf32>
      %45 = tpu.matmul %41, %44, %cst_32 {dimension_numbers = #tpu.dot_dimension_numbers<[1], [0], [0], [1], [0, 0, 1, 1], [], []>} : vector<16x88xf32>, vector<88x32xf32>, vector<16x32xf32> -> vector<16x32xf32>
      %c0_33 = arith.constant 0 : index
      %c0_34 = arith.constant 0 : index
      %c0_35 = arith.constant 0 : index
      %46 = vector.load %arg8[%c0_33, %c0_34, %c0_35] : memref<3x1x32xf32, #tpu.memory_space<vmem>>, vector<1x1x32xf32>
      %47 = vector.shape_cast %46 : vector<1x1x32xf32> to vector<1x32xf32>
      %48 = vector.broadcast %47 : vector<1x32xf32> to vector<16x32xf32>
      %49 = arith.addf %45, %48 : vector<16x32xf32>
      %c0_36 = arith.constant 0 : index
      %c0_37 = arith.constant 0 : index
      %c0_38 = arith.constant 0 : index
      %50 = vector.load %arg9[%c0_36, %c0_37, %c0_38] : memref<3x32x32xf32, #tpu.memory_space<vmem>>, vector<1x32x32xf32>
      %51 = vector.shape_cast %50 : vector<1x32x32xf32> to vector<32x32xf32>
      %cst_39 = arith.constant dense<0.000000e+00> : vector<16x32xf32>
      %52 = tpu.matmul %42, %51, %cst_39 {dimension_numbers = #tpu.dot_dimension_numbers<[1], [0], [0], [1], [0, 0, 1, 1], [], []>} : vector<16x32xf32>, vector<32x32xf32>, vector<16x32xf32> -> vector<16x32xf32>
      %c0_40 = arith.constant 0 : index
      %c0_41 = arith.constant 0 : index
      %c0_42 = arith.constant 0 : index
      %53 = vector.load %arg10[%c0_40, %c0_41, %c0_42] : memref<3x1x32xf32, #tpu.memory_space<vmem>>, vector<1x1x32xf32>
      %54 = vector.shape_cast %53 : vector<1x1x32xf32> to vector<1x32xf32>
      %55 = vector.broadcast %54 : vector<1x32xf32> to vector<16x32xf32>
      %56 = arith.addf %52, %55 : vector<16x32xf32>
      %57 = arith.addf %49, %56 : vector<16x32xf32>
      %58 = arith.negf %57 : vector<16x32xf32>
      %59 = math.exp %58 : vector<16x32xf32>
      %cst_43 = arith.constant 1.000000e+00 : f32
      %60 = vector.broadcast %cst_43 : f32 to vector<16x32xf32>
      %61 = arith.addf %60, %59 : vector<16x32xf32>
      %62 = arith.divf %60, %61 : vector<16x32xf32>
      %c1 = arith.constant 1 : index
      %c0_44 = arith.constant 0 : index
      %c0_45 = arith.constant 0 : index
      %63 = vector.load %arg7[%c1, %c0_44, %c0_45] : memref<3x88x32xf32, #tpu.memory_space<vmem>>, vector<1x88x32xf32>
      %64 = vector.shape_cast %63 : vector<1x88x32xf32> to vector<88x32xf32>
      %cst_46 = arith.constant dense<0.000000e+00> : vector<16x32xf32>
      %65 = tpu.matmul %41, %64, %cst_46 {dimension_numbers = #tpu.dot_dimension_numbers<[1], [0], [0], [1], [0, 0, 1, 1], [], []>} : vector<16x88xf32>, vector<88x32xf32>, vector<16x32xf32> -> vector<16x32xf32>
      %c1_47 = arith.constant 1 : index
      %c0_48 = arith.constant 0 : index
      %c0_49 = arith.constant 0 : index
      %66 = vector.load %arg8[%c1_47, %c0_48, %c0_49] : memref<3x1x32xf32, #tpu.memory_space<vmem>>, vector<1x1x32xf32>
      %67 = vector.shape_cast %66 : vector<1x1x32xf32> to vector<1x32xf32>
      %68 = vector.broadcast %67 : vector<1x32xf32> to vector<16x32xf32>
      %69 = arith.addf %65, %68 : vector<16x32xf32>
      %c1_50 = arith.constant 1 : index
      %c0_51 = arith.constant 0 : index
      %c0_52 = arith.constant 0 : index
      %70 = vector.load %arg9[%c1_50, %c0_51, %c0_52] : memref<3x32x32xf32, #tpu.memory_space<vmem>>, vector<1x32x32xf32>
      %71 = vector.shape_cast %70 : vector<1x32x32xf32> to vector<32x32xf32>
      %cst_53 = arith.constant dense<0.000000e+00> : vector<16x32xf32>
      %72 = tpu.matmul %42, %71, %cst_53 {dimension_numbers = #tpu.dot_dimension_numbers<[1], [0], [0], [1], [0, 0, 1, 1], [], []>} : vector<16x32xf32>, vector<32x32xf32>, vector<16x32xf32> -> vector<16x32xf32>
      %c1_54 = arith.constant 1 : index
      %c0_55 = arith.constant 0 : index
      %c0_56 = arith.constant 0 : index
      %73 = vector.load %arg10[%c1_54, %c0_55, %c0_56] : memref<3x1x32xf32, #tpu.memory_space<vmem>>, vector<1x1x32xf32>
      %74 = vector.shape_cast %73 : vector<1x1x32xf32> to vector<1x32xf32>
      %75 = vector.broadcast %74 : vector<1x32xf32> to vector<16x32xf32>
      %76 = arith.addf %72, %75 : vector<16x32xf32>
      %77 = arith.addf %69, %76 : vector<16x32xf32>
      %78 = arith.negf %77 : vector<16x32xf32>
      %79 = math.exp %78 : vector<16x32xf32>
      %cst_57 = arith.constant 1.000000e+00 : f32
      %80 = vector.broadcast %cst_57 : f32 to vector<16x32xf32>
      %81 = arith.addf %80, %79 : vector<16x32xf32>
      %82 = arith.divf %80, %81 : vector<16x32xf32>
      %c2 = arith.constant 2 : index
      %c0_58 = arith.constant 0 : index
      %c0_59 = arith.constant 0 : index
      %83 = vector.load %arg7[%c2, %c0_58, %c0_59] : memref<3x88x32xf32, #tpu.memory_space<vmem>>, vector<1x88x32xf32>
      %84 = vector.shape_cast %83 : vector<1x88x32xf32> to vector<88x32xf32>
      %cst_60 = arith.constant dense<0.000000e+00> : vector<16x32xf32>
      %85 = tpu.matmul %41, %84, %cst_60 {dimension_numbers = #tpu.dot_dimension_numbers<[1], [0], [0], [1], [0, 0, 1, 1], [], []>} : vector<16x88xf32>, vector<88x32xf32>, vector<16x32xf32> -> vector<16x32xf32>
      %c2_61 = arith.constant 2 : index
      %c0_62 = arith.constant 0 : index
      %c0_63 = arith.constant 0 : index
      %86 = vector.load %arg8[%c2_61, %c0_62, %c0_63] : memref<3x1x32xf32, #tpu.memory_space<vmem>>, vector<1x1x32xf32>
      %87 = vector.shape_cast %86 : vector<1x1x32xf32> to vector<1x32xf32>
      %88 = vector.broadcast %87 : vector<1x32xf32> to vector<16x32xf32>
      %89 = arith.addf %85, %88 : vector<16x32xf32>
      %c2_64 = arith.constant 2 : index
      %c0_65 = arith.constant 0 : index
      %c0_66 = arith.constant 0 : index
      %90 = vector.load %arg9[%c2_64, %c0_65, %c0_66] : memref<3x32x32xf32, #tpu.memory_space<vmem>>, vector<1x32x32xf32>
      %91 = vector.shape_cast %90 : vector<1x32x32xf32> to vector<32x32xf32>
      %cst_67 = arith.constant dense<0.000000e+00> : vector<16x32xf32>
      %92 = tpu.matmul %42, %91, %cst_67 {dimension_numbers = #tpu.dot_dimension_numbers<[1], [0], [0], [1], [0, 0, 1, 1], [], []>} : vector<16x32xf32>, vector<32x32xf32>, vector<16x32xf32> -> vector<16x32xf32>
      %c2_68 = arith.constant 2 : index
      %c0_69 = arith.constant 0 : index
      %c0_70 = arith.constant 0 : index
      %93 = vector.load %arg10[%c2_68, %c0_69, %c0_70] : memref<3x1x32xf32, #tpu.memory_space<vmem>>, vector<1x1x32xf32>
      %94 = vector.shape_cast %93 : vector<1x1x32xf32> to vector<1x32xf32>
      %95 = vector.broadcast %94 : vector<1x32xf32> to vector<16x32xf32>
      %96 = arith.addf %92, %95 : vector<16x32xf32>
      %97 = arith.mulf %62, %96 : vector<16x32xf32>
      %98 = arith.addf %89, %97 : vector<16x32xf32>
      %99 = math.tanh %98 : vector<16x32xf32>
      %cst_71 = arith.constant 1.000000e+00 : f32
      %100 = vector.broadcast %cst_71 : f32 to vector<16x32xf32>
      %101 = arith.subf %100, %82 : vector<16x32xf32>
      %102 = arith.mulf %101, %99 : vector<16x32xf32>
      %103 = arith.mulf %82, %42 : vector<16x32xf32>
      %104 = arith.addf %102, %103 : vector<16x32xf32>
      %c0_72 = arith.constant 0 : index
      %c0_73 = arith.constant 0 : index
      %105 = vector.load %arg11[%c0_72, %c0_73] : memref<16x32xf32, #tpu.memory_space<vmem>>, vector<16x32xf32>
      tpu.vector_store %arg11[%c0_72, %c0_73], %104 {strides = array<i32>} : memref<16x32xf32, #tpu.memory_space<vmem>>, vector<16x32xf32>,
      %cst_74 = arith.constant 0.000000e+00 : f32
      %106 = vector.broadcast %cst_74 : f32 to vector<16x1xf32>
      %107 = arith.cmpf ogt, %35, %106 : vector<16x1xf32>
      %c0_75 = arith.constant 0 : index
      %c0_76 = arith.constant 0 : index
      %108 = vector.load %arg15[%c0_75, %c0_76] : memref<16x1xi32, #tpu.memory_space<vmem>>, vector<16x1xi32>
      %c0_77 = arith.constant 0 : index
      %c0_78 = arith.constant 0 : index
      %109 = vector.load %arg3[%c0_77, %c0_78] : memref<16x1xi32, #tpu.memory_space<vmem>>, vector<16x1xi32>
      %110 = arith.select %107, %108, %109 : vector<16x1xi1>, vector<16x1xi32>
      %c0_79 = arith.constant 0 : index
      %c0_80 = arith.constant 0 : index
      %111 = vector.load %arg12[%c0_79, %c0_80] : memref<16x1xi32, #tpu.memory_space<vmem>>, vector<16x1xi32>
      tpu.vector_store %arg12[%c0_79, %c0_80], %110 {strides = array<i32>} : memref<16x1xi32, #tpu.memory_space<vmem>>, vector<16x1xi32>,
    } else {
    }
    return
  }
  func.func @transform_0(%arg0: i32, %arg1: i32) -> (i32, i32) {
    %c0_i32 = arith.constant 0 : i32
    %c0_i32_0 = arith.constant 0 : i32
    return %arg0, %c0_i32 : i32, i32
  }
  func.func @transform_1(%arg0: i32, %arg1: i32) -> (i32, i32) {
    %c0_i32 = arith.constant 0 : i32
    %c0_i32_0 = arith.constant 0 : i32
    return %arg0, %c0_i32 : i32, i32
  }
  func.func @transform_2(%arg0: i32, %arg1: i32) -> (i32, i32) {
    %c0_i32 = arith.constant 0 : i32
    %c0_i32_0 = arith.constant 0 : i32
    return %arg1, %c0_i32 : i32, i32
  }
  func.func @transform_3(%arg0: i32, %arg1: i32) -> (i32, i32) {
    %c0_i32 = arith.constant 0 : i32
    %c0_i32_0 = arith.constant 0 : i32
    return %c0_i32, %arg1 : i32, i32
  }
  func.func @transform_4(%arg0: i32, %arg1: i32) -> (i32, i32) {
    %c0_i32 = arith.constant 0 : i32
    %c0_i32_0 = arith.constant 0 : i32
    return %c0_i32, %arg1 : i32, i32
  }
  func.func @transform_5(%arg0: i32, %arg1: i32) -> (i32, i32, i32) {
    %c0_i32 = arith.constant 0 : i32
    %c0_i32_0 = arith.constant 0 : i32
    %c0_i32_1 = arith.constant 0 : i32
    %c0_i32_2 = arith.constant 0 : i32
    return %c0_i32, %c0_i32_0, %c0_i32_1 : i32, i32, i32
  }
  func.func @transform_6(%arg0: i32, %arg1: i32) -> (i32, i32, i32) {
    %c0_i32 = arith.constant 0 : i32
    %c0_i32_0 = arith.constant 0 : i32
    %c0_i32_1 = arith.constant 0 : i32
    %c0_i32_2 = arith.constant 0 : i32
    return %c0_i32, %c0_i32_0, %c0_i32_1 : i32, i32, i32
  }
  func.func @transform_7(%arg0: i32, %arg1: i32) -> (i32, i32, i32) {
    %c0_i32 = arith.constant 0 : i32
    %c0_i32_0 = arith.constant 0 : i32
    %c0_i32_1 = arith.constant 0 : i32
    %c0_i32_2 = arith.constant 0 : i32
    return %c0_i32, %c0_i32_0, %c0_i32_1 : i32, i32, i32
  }
  func.func @transform_8(%arg0: i32, %arg1: i32) -> (i32, i32, i32) {
    %c0_i32 = arith.constant 0 : i32
    %c0_i32_0 = arith.constant 0 : i32
    %c0_i32_1 = arith.constant 0 : i32
    %c0_i32_2 = arith.constant 0 : i32
    return %c0_i32, %c0_i32_0, %c0_i32_1 : i32, i32, i32
  }
  func.func @transform_9(%arg0: i32, %arg1: i32) -> (i32, i32) {
    %c0_i32 = arith.constant 0 : i32
    %c0_i32_0 = arith.constant 0 : i32
    return %arg0, %c0_i32 : i32, i32
  }
  func.func @transform_10(%arg0: i32, %arg1: i32) -> (i32, i32) {
    %c0_i32 = arith.constant 0 : i32
    %c0_i32_0 = arith.constant 0 : i32
    return %arg0, %c0_i32 : i32, i32
  }
}

</mosaic_0001>

<llo_original>
// kernel: tpu_custom_call.1
$region0: #{tpu_custom_call.1}
  #allocation0 [shape = 'u32[]', space=smem, size = 0x4, offset = 0x4, fixed_abs, tag = 'smem constant byte address 0x4 - core index']
  #allocation1 [shape = 'u32[144,128]{1,0:T(1,128)}', space=vmem, size = 0x12000, scoped, tag = 'internal scratch']
  #allocation2 [shape = 'f32[16,88]{1,0:T(8,128)}', space=vmem, size = 0x2000, scoped, tag = 'scratch operand']
  #allocation3 [shape = 'f32[16,1]{1,0:T(8,128)}', space=vmem, size = 0x2000, scoped, tag = 'scratch operand']
  #allocation4 [shape = 's32[16,1]{1,0:T(8,128)}', space=vmem, size = 0x2000, scoped, tag = 'scratch operand']
  %s0 = inlined_call_operand.hbm [shape: f32[16,32], index: 0, kind: input, shape index: {}]
  %s1 = inlined_call_operand.hbm [shape: s32[16,1], index: 1, kind: input, shape index: {}]
  %s2 = inlined_call_operand.hbm [shape: f32[256,88], index: 2, kind: input, shape index: {}]
  %s3 = inlined_call_operand.hbm [shape: s32[1,256], index: 3, kind: input, shape index: {}]
  %s4 = inlined_call_operand.hbm [shape: s32[1,256], index: 4, kind: input, shape index: {}]
  %s5 = inlined_call_operand.hbm [shape: f32[3,88,32], index: 5, kind: input, shape index: {}]
  %s6 = inlined_call_operand.hbm [shape: f32[3,1,32], index: 6, kind: input, shape index: {}]
  %s7 = inlined_call_operand.hbm [shape: f32[3,32,32], index: 7, kind: input, shape index: {}]
  %s8 = inlined_call_operand.hbm [shape: f32[3,1,32], index: 8, kind: input, shape index: {}]
  %s9 = inlined_call_operand.hbm [shape: f32[16,32], index: 9, kind: output, shape index: {0}]
  %s10 = inlined_call_operand.hbm [shape: s32[16,1], index: 10, kind: output, shape index: {1}]
  %11 = xla_tuple %s9, %s10
  %s12 = sld [smem:[#allocation0]]
  $region98: #{tpu_custom_call.1} parent=0
    _
  %s14 = ssub.s32 1, %s12
  %s15 = scalar_select 0, %s14, %s12
  $region1: #{tpu_custom_call.1} parent=0
    #allocation5 [shape = 'u8[8192]{0}', space=vmem, size = 0x2000, scoped, tag = 'input window, operand 0, single buffered']
    #allocation6 [shape = 's32[1]{0}', space=sflag, size = 0x4, scoped, tag = 'scoped memory for tpu_custom_call.1']
    #allocation7 [shape = 's32[1]{0}', space=sflag, size = 0x4, scoped, tag = 'scoped memory for tpu_custom_call.1']
    #allocation8 [shape = 'u8[8192]{0}', space=vmem, size = 0x2000, scoped, tag = 'input window, operand 1, single buffered']
    #allocation9 [shape = 's32[1]{0}', space=sflag, size = 0x4, scoped, tag = 'scoped memory for tpu_custom_call.1']
    #allocation10 [shape = 'u8[131072]{0}', space=vmem, size = 0x20000, scoped, tag = 'input window, operand 2, single buffered']
    #allocation11 [shape = 'u8[1024]{0}', space=vmem, size = 0x400, scoped, tag = 'input window, operand 3, single buffered']
    #allocation12 [shape = 's32[1]{0}', space=sflag, size = 0x4, scoped, tag = 'scoped memory for tpu_custom_call.1']
    #allocation13 [shape = 'u8[1024]{0}', space=vmem, size = 0x400, scoped, tag = 'input window, operand 4, single buffered']
    #allocation14 [shape = 'u8[135168]{0}', space=vmem, size = 0x21000, scoped, tag = 'input window, operand 5, single buffered']
    #allocation15 [shape = 's32[1]{0}', space=sflag, size = 0x4, scoped, tag = 'scoped memory for tpu_custom_call.1']
    #allocation16 [shape = 'u8[1536]{0}', space=vmem, size = 0x800, scoped, tag = 'input window, operand 6, single buffered']
    #allocation17 [shape = 'u8[49152]{0}', space=vmem, size = 0xc000, scoped, tag = 'input window, operand 7, single buffered']
    #allocation18 [shape = 's32[1]{0}', space=sflag, size = 0x4, scoped, tag = 'scoped memory for tpu_custom_call.1']
    #allocation19 [shape = 'u8[1536]{0}', space=vmem, size = 0x800, scoped, tag = 'input window, operand 8, single buffered']
    #allocation20 [shape = 'u8[8192]{0}', space=vmem, size = 0x2000, scoped, tag = 'output window, operand 0, single buffered']
    #allocation21 [shape = 'u8[8192]{0}', space=vmem, size = 0x2000, scoped, tag = 'output window, operand 1, single buffered']
    #allocation22 [shape = 's32[1]{0}', space=sflag, size = 0x4, scoped, tag = 'scoped memory for tpu_custom_call.1']
    %16 = vsyncpa [#allocation6], 0
    %17 = vsyncpa [#allocation9], 0
    %18 = vsyncpa [#allocation12], 0
    %19 = vsyncpa [#allocation15], 0
    %20 = vsyncpa [#allocation18], 0
    %21 = vsyncpa [#allocation7], 0
    %22 = vsyncpa [#allocation22], 0
    // Predicated region
    $region2: #{tpu_custom_call.1} parent=1 // pred_check
      _
    $region3: #{tpu_custom_call.1} parent=1 // pred_check_branch
      %24 = sbr.rel (0) target = $region5
    $region4: #{tpu_custom_call.1} parent=1 // pred_region
      %s26 = ssub.s32 256, 256
      %27 = vsyncadd [#allocation6], %s26
      %s28 = sshll.u32 [#allocation5], 4
      %s29 = int_to_ptr.vmem [resolvable:$true] %s28
      %34 = dma.hbm_to_vmem [thread:$0]  %s0, 256, %s29, [#allocation6], 128, 128, 8
    $region5: #{tpu_custom_call.1} parent=1 // pred_fallthru
      _
    // Predicated region
    $region6: #{tpu_custom_call.1} parent=1 // pred_check
      _
    $region7: #{tpu_custom_call.1} parent=1 // pred_check_branch
      %36 = sbr.rel (0) target = $region9
    $region8: #{tpu_custom_call.1} parent=1 // pred_region
      %s38 = ssub.s32 256, 256
      %39 = vsyncadd [#allocation9], %s38
      %s40 = sshll.u32 [#allocation8], 4
      %s41 = int_to_ptr.vmem [resolvable:$true] %s40
      %46 = dma.hbm_to_vmem [thread:$0]  %s1, 256, %s41, [#allocation9], 128, 128, 8
    $region9: #{tpu_custom_call.1} parent=1 // pred_fallthru
      _
    // Predicated region
    $region10: #{tpu_custom_call.1} parent=1 // pred_check
      _
    $region11: #{tpu_custom_call.1} parent=1 // pred_check_branch
      %48 = sbr.rel (0) target = $region13
    $region12: #{tpu_custom_call.1} parent=1 // pred_region
      %s50 = ssub.s32 4096, 4096
      %51 = vsyncadd [#allocation9], %s50
      %s52 = sshll.u32 [#allocation10], 4
      %s53 = int_to_ptr.vmem [resolvable:$true] %s52
      %58 = dma.hbm_to_vmem [thread:$0]  %s2, 4096, %s53, [#allocation9], 128, 128, 8
    $region13: #{tpu_custom_call.1} parent=1 // pred_fallthru
      _
    // Predicated region
    $region14: #{tpu_custom_call.1} parent=1 // pred_check
      _
    $region15: #{tpu_custom_call.1} parent=1 // pred_check_branch
      %60 = sbr.rel (0) target = $region17
    $region16: #{tpu_custom_call.1} parent=1 // pred_region
      %s62 = ssub.s32 32, 32
      %63 = vsyncadd [#allocation12], %s62
      %s65 = sshll.u32 [#allocation11], 4
      %s66 = int_to_ptr.vmem [resolvable:$true] %s65
      %68 = dma.hbm_to_vmem [thread:$0]  %s3, 32, %s66, [#allocation12]
    $region17: #{tpu_custom_call.1} parent=1 // pred_fallthru
      _
    // Predicated region
    $region18: #{tpu_custom_call.1} parent=1 // pred_check
      _
    $region19: #{tpu_custom_call.1} parent=1 // pred_check_branch
      %70 = sbr.rel (0) target = $region21
    $region20: #{tpu_custom_call.1} parent=1 // pred_region
      %s72 = ssub.s32 32, 32
      %73 = vsyncadd [#allocation12], %s72
      %s75 = sshll.u32 [#allocation13], 4
      %s76 = int_to_ptr.vmem [resolvable:$true] %s75
      %78 = dma.hbm_to_vmem [thread:$0]  %s4, 32, %s76, [#allocation12]
    $region21: #{tpu_custom_call.1} parent=1 // pred_fallthru
      _
    // Predicated region
    $region22: #{tpu_custom_call.1} parent=1 // pred_check
      _
    $region23: #{tpu_custom_call.1} parent=1 // pred_check_branch
      %80 = sbr.rel (0) target = $region25
    $region24: #{tpu_custom_call.1} parent=1 // pred_region
      %s82 = ssub.s32 4224, 4224
      %83 = vsyncadd [#allocation15], %s82
      %s84 = sshll.u32 [#allocation14], 4
      %s85 = int_to_ptr.vmem [resolvable:$true] %s84
      %90 = dma.hbm_to_vmem [thread:$0]  %s5, 4224, %s85, [#allocation15], 128, 128, 8
    $region25: #{tpu_custom_call.1} parent=1 // pred_fallthru
      _
    // Predicated region
    $region26: #{tpu_custom_call.1} parent=1 // pred_check
      _
    $region27: #{tpu_custom_call.1} parent=1 // pred_check_branch
      %92 = sbr.rel (0) target = $region29
    $region28: #{tpu_custom_call.1} parent=1 // pred_region
      %s94 = ssub.s32 48, 48
      %95 = vsyncadd [#allocation15], %s94
      %s96 = sshll.u32 [#allocation16], 4
      %s97 = int_to_ptr.vmem [resolvable:$true] %s96
      %102 = dma.hbm_to_vmem [thread:$0]  %s6, 48, %s97, [#allocation15], 16, 16, 1
    $region29: #{tpu_custom_call.1} parent=1 // pred_fallthru
      _
    // Predicated region
    $region30: #{tpu_custom_call.1} parent=1 // pred_check
      _
    $region31: #{tpu_custom_call.1} parent=1 // pred_check_branch
      %104 = sbr.rel (0) target = $region33
    $region32: #{tpu_custom_call.1} parent=1 // pred_region
      %s106 = ssub.s32 1536, 1536
      %107 = vsyncadd [#allocation18], %s106
      %s108 = sshll.u32 [#allocation17], 4
      %s109 = int_to_ptr.vmem [resolvable:$true] %s108
      %114 = dma.hbm_to_vmem [thread:$0]  %s7, 1536, %s109, [#allocation18], 128, 128, 8
    $region33: #{tpu_custom_call.1} parent=1 // pred_fallthru
      _
    // Predicated region
    $region34: #{tpu_custom_call.1} parent=1 // pred_check
      _
    $region35: #{tpu_custom_call.1} parent=1 // pred_check_branch
      %116 = sbr.rel (0) target = $region37
    $region36: #{tpu_custom_call.1} parent=1 // pred_region
      %s118 = ssub.s32 48, 48
      %119 = vsyncadd [#allocation18], %s118
      %s120 = sshll.u32 [#allocation19], 4
      %s121 = int_to_ptr.vmem [resolvable:$true] %s120
      %126 = dma.hbm_to_vmem [thread:$0]  %s8, 48, %s121, [#allocation18], 16, 16, 1
    $region37: #{tpu_custom_call.1} parent=1 // pred_fallthru
      _
    // Predicated region
    $region38: #{tpu_custom_call.1} parent=1 // pred_check
      _
    $region39: #{tpu_custom_call.1} parent=1 // pred_check_branch
      %128 = sbr.rel (0) target = $region41
    $region40: #{tpu_custom_call.1} parent=1 // pred_region
      %129 = dma.done [#allocation6], 256
    $region41: #{tpu_custom_call.1} parent=1 // pred_fallthru
      _
    // Predicated region
    $region42: #{tpu_custom_call.1} parent=1 // pred_check
      _
    $region43: #{tpu_custom_call.1} parent=1 // pred_check_branch
      %131 = sbr.rel (0) target = $region45
    $region44: #{tpu_custom_call.1} parent=1 // pred_region
      %132 = dma.done [#allocation9], 256
    $region45: #{tpu_custom_call.1} parent=1 // pred_fallthru
      _
    // Predicated region
    $region46: #{tpu_custom_call.1} parent=1 // pred_check
      _
    $region47: #{tpu_custom_call.1} parent=1 // pred_check_branch
      %134 = sbr.rel (0) target = $region49
    $region48: #{tpu_custom_call.1} parent=1 // pred_region
      %135 = dma.done [#allocation9], 4096
    $region49: #{tpu_custom_call.1} parent=1 // pred_fallthru
      _
    // Predicated region
    $region50: #{tpu_custom_call.1} parent=1 // pred_check
      _
    $region51: #{tpu_custom_call.1} parent=1 // pred_check_branch
      %137 = sbr.rel (0) target = $region53
    $region52: #{tpu_custom_call.1} parent=1 // pred_region
      %138 = dma.done [#allocation12], 32
    $region53: #{tpu_custom_call.1} parent=1 // pred_fallthru
      _
    // Predicated region
    $region54: #{tpu_custom_call.1} parent=1 // pred_check
      _
    $region55: #{tpu_custom_call.1} parent=1 // pred_check_branch
      %140 = sbr.rel (0) target = $region57
    $region56: #{tpu_custom_call.1} parent=1 // pred_region
      %141 = dma.done [#allocation12], 32
    $region57: #{tpu_custom_call.1} parent=1 // pred_fallthru
      _
    // Predicated region
    $region58: #{tpu_custom_call.1} parent=1 // pred_check
      _
    $region59: #{tpu_custom_call.1} parent=1 // pred_check_branch
      %143 = sbr.rel (0) target = $region61
    $region60: #{tpu_custom_call.1} parent=1 // pred_region
      %144 = dma.done [#allocation15], 4224
    $region61: #{tpu_custom_call.1} parent=1 // pred_fallthru
      _
    // Predicated region
    $region62: #{tpu_custom_call.1} parent=1 // pred_check
      _
    $region63: #{tpu_custom_call.1} parent=1 // pred_check_branch
      %146 = sbr.rel (0) target = $region65
    $region64: #{tpu_custom_call.1} parent=1 // pred_region
      %147 = dma.done [#allocation15], 48
    $region65: #{tpu_custom_call.1} parent=1 // pred_fallthru
      _
    // Predicated region
    $region66: #{tpu_custom_call.1} parent=1 // pred_check
      _
    $region67: #{tpu_custom_call.1} parent=1 // pred_check_branch
      %149 = sbr.rel (0) target = $region69
    $region68: #{tpu_custom_call.1} parent=1 // pred_region
      %150 = dma.done [#allocation18], 1536
    $region69: #{tpu_custom_call.1} parent=1 // pred_fallthru
      _
    // Predicated region
    $region70: #{tpu_custom_call.1} parent=1 // pred_check
      _
    $region71: #{tpu_custom_call.1} parent=1 // pred_check_branch
      %152 = sbr.rel (0) target = $region73
    $region72: #{tpu_custom_call.1} parent=1 // pred_region
      %153 = dma.done [#allocation18], 48
    $region73: #{tpu_custom_call.1} parent=1 // pred_fallthru
      _
    %p154 = scmp.eq.s32.totalorder 0, 0
    // Predicated region
    $region74: #{tpu_custom_call.1} parent=1 // pred_check
      %p155 = pneg %p154
    $region75: #{tpu_custom_call.1} parent=1 // pred_check_branch
      %157 = sbr.rel (%p155) target = $region77
    $region76: #{tpu_custom_call.1} parent=1 // pred_region
      %vm158 = vcmask 719872
      %159 = vst.msk [vmem:[#allocation2] sm:$0xff] %vm158, 0.0
      %160 = vst.msk [vmem:[#allocation2 + $0x8] sm:$0xff] %vm158, 0.0
      %vm161 = vcmask 7168
      %162 = vst.msk [vmem:[#allocation3] sm:$0xff] %vm161, 0.0
      %163 = vst.msk [vmem:[#allocation3 + $0x8] sm:$0xff] %vm161, 0.0
      %164 = vst.msk [vmem:[#allocation4] sm:$0xff] %vm161, 2147483648
      %165 = vst.msk [vmem:[#allocation4 + $0x8] sm:$0xff] %vm161, 2147483648
    $region77: #{tpu_custom_call.1} parent=1 // pred_fallthru
      _
    %s166 = smul.u32 0, 16
    %v167 = vlaneseq
    %v168 = vshrl.u32 %v167, 7
    %v169 = vadd.s32 %v168, 8
    %v170 = vstv %s166
    %v171 = vadd.s32 %v168, %v170
    %v172 = vadd.s32 %v169, %v170
    %v173 = vld [vmem:[#allocation13] sm:$0x3]
    %v174 = vlaneseq
    %v175 = vshrl.u32 %v174, 7
    %v176 = vsub.s32 0, %v175
    %v177 = vrot.slane %v173, %v176
    %v178 = vlaneseq
    %v179 = vshrl.u32 %v178, 7
    %v180 = vsub.s32 1, %v179
    %v181 = vrot.slane %v173, %v180
    %vm182 = vcmp.eq.s32.totalorder %v177, %v171
    %vm183 = vcmp.eq.s32.totalorder %v181, %v171
    %vm184 = vcmp.eq.s32.totalorder %v177, %v172
    %vm185 = vcmp.eq.s32.totalorder %v181, %v172
    %v186 = vsel %vm182, 1, 0
    %v187 = vsel %vm183, 1, 0
    %v188 = vsel %vm184, 1, 0
    %v189 = vsel %vm185, 1, 0
    %v190 = vcvt.s32.f32 %v186
    %v191 = vcvt.s32.f32 %v187
    %v192 = vcvt.s32.f32 %v188
    %v193 = vcvt.s32.f32 %v189
    %v194 = vld [vmem:[#allocation2] sm:$0xff]
    %v195 = vld [vmem:[#allocation2 + $0x8] sm:$0xff]
    %v196 = vld [vmem:[#allocation10] sm:$0xff]
    %v197 = vld [vmem:[#allocation10 + $0x8] sm:$0xff]
    %v198 = vld [vmem:[#allocation10 + $0x10] sm:$0xff]
    %v199 = vld [vmem:[#allocation10 + $0x18] sm:$0xff]
    %v200 = vld [vmem:[#allocation10 + $0x20] sm:$0xff]
    %v201 = vld [vmem:[#allocation10 + $0x28] sm:$0xff]
    %v202 = vld [vmem:[#allocation10 + $0x30] sm:$0xff]
    %v203 = vld [vmem:[#allocation10 + $0x38] sm:$0xff]
    %v204 = vld [vmem:[#allocation10 + $0x40] sm:$0xff]
    %v205 = vld [vmem:[#allocation10 + $0x48] sm:$0xff]
    %v206 = vld [vmem:[#allocation10 + $0x50] sm:$0xff]
    %v207 = vld [vmem:[#allocation10 + $0x58] sm:$0xff]
    %v208 = vld [vmem:[#allocation10 + $0x60] sm:$0xff]
    %v209 = vld [vmem:[#allocation10 + $0x68] sm:$0xff]
    %v210 = vld [vmem:[#allocation10 + $0x70] sm:$0xff]
    %v211 = vld [vmem:[#allocation10 + $0x78] sm:$0xff]
    %v212 = vld [vmem:[#allocation10 + $0x80] sm:$0xff]
    %v213 = vld [vmem:[#allocation10 + $0x88] sm:$0xff]
    %v214 = vld [vmem:[#allocation10 + $0x90] sm:$0xff]
    %v215 = vld [vmem:[#allocation10 + $0x98] sm:$0xff]
    %v216 = vld [vmem:[#allocation10 + $0xa0] sm:$0xff]
    %v217 = vld [vmem:[#allocation10 + $0xa8] sm:$0xff]
    %v218 = vld [vmem:[#allocation10 + $0xb0] sm:$0xff]
    %v219 = vld [vmem:[#allocation10 + $0xb8] sm:$0xff]
    %v220 = vld [vmem:[#allocation10 + $0xc0] sm:$0xff]
    %v221 = vld [vmem:[#allocation10 + $0xc8] sm:$0xff]
    %v222 = vld [vmem:[#allocation10 + $0xd0] sm:$0xff]
    %v223 = vld [vmem:[#allocation10 + $0xd8] sm:$0xff]
    %v224 = vld [vmem:[#allocation10 + $0xe0] sm:$0xff]
    %v225 = vld [vmem:[#allocation10 + $0xe8] sm:$0xff]
    %v226 = vld [vmem:[#allocation10 + $0xf0] sm:$0xff]
    %v227 = vld [vmem:[#allocation10 + $0xf8] sm:$0xff]
    %228 = vmatprep.subr.mxu0 0.0
    %229 = vmatpush1.msra.mxu0 %v196
    %230 = vmatprep.subr.mxu0 0.0
    %231 = vmatpush1.msra.mxu0 %v197
    %232 = vmatprep.subr.mxu0 0.0
    %233 = vmatpush1.msra.mxu0 %v198
    %234 = vmatprep.subr.mxu0 0.0
    %235 = vmatpush1.msra.mxu0 %v199
    %236 = vmatprep.subr.mxu0 0.0
    %237 = vmatpush1.msra.mxu0 %v200
    %238 = vmatprep.subr.mxu0 0.0
    %239 = vmatpush1.msra.mxu0 %v201
    %240 = vmatprep.subr.mxu0 0.0
    %241 = vmatpush1.msra.mxu0 %v202
    %242 = vmatprep.subr.mxu0 0.0
    %243 = vmatpush1.msra.mxu0 %v203
    %244 = vmatprep.subr.mxu0 0.0
    %245 = vmatpush1.msra.mxu0 %v204
    %246 = vmatprep.subr.mxu0 0.0
    %247 = vmatpush1.msra.mxu0 %v205
    %248 = vmatprep.subr.mxu0 0.0
    %249 = vmatpush1.msra.mxu0 %v206
    %250 = vmatprep.subr.mxu0 0.0
    %251 = vmatpush1.msra.mxu0 %v207
    %252 = vmatprep.subr.mxu0 0.0
    %253 = vmatpush1.msra.mxu0 %v208
    %254 = vmatprep.subr.mxu0 0.0
    %255 = vmatpush1.msra.mxu0 %v209
    %256 = vmatprep.subr.mxu0 0.0
    %257 = vmatpush1.msra.mxu0 %v210
    %258 = vmatprep.subr.mxu0 0.0
    %259 = vmatpush1.msra.mxu0 %v211
    %260 = vmatprep.subr.mxu0 0.0
    %261 = vmatpush1.msra.mxu0 %v212
    %262 = vmatprep.subr.mxu0 0.0
    %263 = vmatpush1.msra.mxu0 %v213
    %264 = vmatprep.subr.mxu0 0.0
    %265 = vmatpush1.msra.mxu0 %v214
    %266 = vmatprep.subr.mxu0 0.0
    %267 = vmatpush1.msra.mxu0 %v215
    %268 = vmatprep.subr.mxu0 0.0
    %269 = vmatpush1.msra.mxu0 %v216
    %270 = vmatprep.subr.mxu0 0.0
    %271 = vmatpush1.msra.mxu0 %v217
    %272 = vmatprep.subr.mxu0 0.0
    %273 = vmatpush1.msra.mxu0 %v218
    %274 = vmatprep.subr.mxu0 0.0
    %275 = vmatpush1.msra.mxu0 %v219
    %276 = vmatprep.subr.mxu0 0.0
    %277 = vmatpush1.msra.mxu0 %v220
    %278 = vmatprep.subr.mxu0 0.0
    %279 = vmatpush1.msra.mxu0 %v221
    %280 = vmatprep.subr.mxu0 0.0
    %281 = vmatpush1.msra.mxu0 %v222
    %282 = vmatprep.subr.mxu0 0.0
    %283 = vmatpush1.msra.mxu0 %v223
    %284 = vmatprep.subr.mxu0 0.0
    %285 = vmatpush1.msra.mxu0 %v224
    %286 = vmatprep.subr.mxu0 0.0
    %287 = vmatpush1.msra.mxu0 %v225
    %288 = vmatprep.subr.mxu0 0.0
    %289 = vmatpush1.msra.mxu0 %v226
    %290 = vmatprep.subr.mxu0 0.0
    %291 = vmatpush1.msra.mxu0 %v227
    %292 = vmatprep.mubr.f32.mxu0 %v191
    %293 = vmatmul.mubr.f32.gmra.mrb[0].mxu0 %v190
    %v294 = vpop.f32.mrb[0].mxu0
    %v295 = vadd.f32 0.0, %v294
    %v296 = vpop.f32.mrb[0].mxu0
    %297 = vmatprep.mubr.f32.mxu0 %v193
    %298 = vmatmul.mubr.f32.gmra.mrb[0].mxu0 %v192
    %v299 = vpop.f32.mrb[0].mxu0
    %v300 = vadd.f32 0.0, %v299
    %v301 = vpop.f32.mrb[0].mxu0
    %302 = vdwg.mxu0
    %v303 = vadd.f32 %v194, %v295
    %v304 = vadd.f32 %v195, %v300
    %vm305 = vcmask 719872
    %306 = vst.msk [vmem:[#allocation2] sm:$0xff] %vm305, %v303
    %307 = vst.msk [vmem:[#allocation2 + $0x8] sm:$0xff] %vm305, %v304
    %v308 = vld [vmem:[#allocation3] sm:$0xff]
    %v309 = vld [vmem:[#allocation3 + $0x8] sm:$0xff]
    %v310 = vadd.f32 %v190, %v191
    %311 = vadd.xlane.f32.xlu0 %v310
    %v312 = vpop.xlane.xlu0 %311
    %v313 = vadd.f32 %v192, %v193
    %314 = vadd.xlane.f32.xlu0 %v313
    %v315 = vpop.xlane.xlu0 %314
    %v316 = vadd.f32 %v308, %v312
    %v317 = vadd.f32 %v309, %v315
    %vm318 = vcmask 7168
    %319 = vst.msk [vmem:[#allocation3] sm:$0xff] %vm318, %v316
    %320 = vst.msk [vmem:[#allocation3 + $0x8] sm:$0xff] %vm318, %v317
    %v321 = vld [vmem:[#allocation11] sm:$0x3]
    %v322 = vlaneseq
    %v323 = vshrl.u32 %v322, 7
    %v324 = vsub.s32 0, %v323
    %v325 = vrot.slane %v321, %v324
    %v326 = vlaneseq
    %v327 = vshrl.u32 %v326, 7
    %v328 = vsub.s32 1, %v327
    %v329 = vrot.slane %v321, %v328
    %v330 = vsel %vm182, %v325, 2147483648
    %v331 = vsel %vm183, %v329, 2147483648
    %v332 = vsel %vm184, %v325, 2147483648
    %v333 = vsel %vm185, %v329, 2147483648
    %v334 = vld [vmem:[#allocation4] sm:$0xff]
    %v335 = vld [vmem:[#allocation4 + $0x8] sm:$0xff]
    %vm336 = vcmp.gt.s32.totalorder %v330, %v331
    %v337 = vsel %vm336, %v330, %v331
    %v338 = vand.u32 %v337, 65535
    %v339 = vshra.s32 %v337, 16
    %v340 = vcvt.s32.f32 %v338
    %v341 = vcvt.s32.f32 %v339
    %342 = vmax.xlane.f32.xlu0 %v341
    %v343 = vpop.xlane.xlu0 %342
    %vm344 = vcmp.eq.f32.partialorder %v341, %v343
    %v345 = vsel %vm344, %v340, -inf
    %346 = vmax.xlane.f32.xlu0 %v345
    %v347 = vpop.xlane.xlu0 %346
    %v348 = vcvt.f32.s32 %v347
    %v349 = vcvt.f32.s32 %v343
    %v350 = vshll.u32 %v349, 16
    %v351 = vadd.s32 %v350, %v348
    %vm352 = vcmp.gt.s32.totalorder %v332, %v333
    %v353 = vsel %vm352, %v332, %v333
    %v354 = vand.u32 %v353, 65535
    %v355 = vshra.s32 %v353, 16
    %v356 = vcvt.s32.f32 %v354
    %v357 = vcvt.s32.f32 %v355
    %358 = vmax.xlane.f32.xlu0 %v357
    %v359 = vpop.xlane.xlu0 %358
    %vm360 = vcmp.eq.f32.partialorder %v357, %v359
    %v361 = vsel %vm360, %v356, -inf
    %362 = vmax.xlane.f32.xlu0 %v361
    %v363 = vpop.xlane.xlu0 %362
    %v364 = vcvt.f32.s32 %v363
    %v365 = vcvt.f32.s32 %v359
    %v366 = vshll.u32 %v365, 16
    %v367 = vadd.s32 %v366, %v364
    %vm368 = vcmp.gt.s32.totalorder %v334, %v351
    %v369 = vsel %vm368, %v334, %v351
    %vm370 = vcmp.gt.s32.totalorder %v335, %v367
    %v371 = vsel %vm370, %v335, %v367
    %372 = vst.msk [vmem:[#allocation4] sm:$0xff] %vm318, %v369
    %373 = vst.msk [vmem:[#allocation4 + $0x8] sm:$0xff] %vm318, %v371
    // Predicated region
    $region78: #{tpu_custom_call.1} parent=1 // pred_check
      %p374 = pneg %p154
    $region79: #{tpu_custom_call.1} parent=1 // pred_check_branch
      %376 = sbr.rel (%p374) target = $region81
    $region80: #{tpu_custom_call.1} parent=1 // pred_region
      %v377 = vld [vmem:[#allocation3] sm:$0xff]
      %v378 = vld [vmem:[#allocation3 + $0x8] sm:$0xff]
      %v379 = vmax.f32 %v377, 1.0
      %v380 = vmax.f32 %v378, 1.0
      %v381 = vrcp.pop %v379
      %v382 = vrcp.pop %v380
      %v383 = vld [vmem:[#allocation2] sm:$0xff]
      %v384 = vld [vmem:[#allocation2 + $0x8] sm:$0xff]
      %386 = vset.pattern.permute.xlu0 0
      %387 = vperm.xlu0 %386, %v381
      %v388 = vpop.permute.xlu0 %387
      %391 = vset.pattern.permute.xlu0 0
      %392 = vperm.xlu0 %391, %v382
      %v393 = vpop.permute.xlu0 %392
      %v395 = vmul.f32 %v383, %v388
      %v396 = vmul.f32 %v384, %v393
      %v397 = vld [vmem:[#allocation5] sm:$0xff]
      %v398 = vld [vmem:[#allocation5 + $0x8] sm:$0xff]
      %v399 = vld [vmem:[#allocation14] sm:$0xff]
      %v400 = vld [vmem:[#allocation14 + $0x8] sm:$0xff]
      %v401 = vld [vmem:[#allocation14 + $0x10] sm:$0xff]
      %v402 = vld [vmem:[#allocation14 + $0x18] sm:$0xff]
      %v403 = vld [vmem:[#allocation14 + $0x20] sm:$0xff]
      %v404 = vld [vmem:[#allocation14 + $0x28] sm:$0xff]
      %v405 = vld [vmem:[#allocation14 + $0x30] sm:$0xff]
      %v406 = vld [vmem:[#allocation14 + $0x38] sm:$0xff]
      %v407 = vld [vmem:[#allocation14 + $0x40] sm:$0xff]
      %v408 = vld [vmem:[#allocation14 + $0x48] sm:$0xff]
      %v409 = vld [vmem:[#allocation14 + $0x50] sm:$0xff]
      %v410 = vld [vmem:[#allocation16] sm:$0x1]
      %v412 = vlaneseq
      %v413 = vshrl.u32 %v412, 7
      %v414 = vsub.s32 0, %v413
      %v415 = vrot.slane %v410, %v414
      %v418 = vsel %vm305, %v395, 0
      %v421 = vsel %vm305, %v396, 0
      %423 = vmatprep.subr.mxu0 0.0
      %424 = vmatpush1.msra.mxu0 %v399
      %425 = vmatprep.subr.mxu0 0.0
      %426 = vmatpush1.msra.mxu0 %v400
      %427 = vmatprep.subr.mxu0 0.0
      %428 = vmatpush1.msra.mxu0 %v401
      %429 = vmatprep.subr.mxu0 0.0
      %430 = vmatpush1.msra.mxu0 %v402
      %431 = vmatprep.subr.mxu0 0.0
      %432 = vmatpush1.msra.mxu0 %v403
      %433 = vmatprep.subr.mxu0 0.0
      %434 = vmatpush1.msra.mxu0 %v404
      %435 = vmatprep.subr.mxu0 0.0
      %436 = vmatpush1.msra.mxu0 %v405
      %437 = vmatprep.subr.mxu0 0.0
      %438 = vmatpush1.msra.mxu0 %v406
      %439 = vmatprep.subr.mxu0 0.0
      %440 = vmatpush1.msra.mxu0 %v407
      %441 = vmatprep.subr.mxu0 0.0
      %442 = vmatpush1.msra.mxu0 %v408
      %443 = vmatprep.subr.mxu0 0.0
      %444 = vmatpush1.msra.mxu0 %v409
      %445 = vmatprep.subr.mxu0 0.0
      %446 = vmatpush1.msra.mxu0 0.0
      %447 = vmatprep.subr.mxu0 0.0
      %448 = vmatpush1.msra.mxu0 0.0
      %449 = vmatprep.subr.mxu0 0.0
      %450 = vmatpush1.msra.mxu0 0.0
      %451 = vmatprep.subr.mxu0 0.0
      %452 = vmatpush1.msra.mxu0 0.0
      %453 = vmatprep.subr.mxu0 0.0
      %454 = vmatpush1.msra.mxu0 0.0
      %455 = vmatprep.subr.mxu0 0.0
      %456 = vmatpush1.msra.mxu0 0.0
      %457 = vmatprep.subr.mxu0 0.0
      %458 = vmatpush1.msra.mxu0 0.0
      %459 = vmatprep.subr.mxu0 0.0
      %460 = vmatpush1.msra.mxu0 0.0
      %461 = vmatprep.subr.mxu0 0.0
      %462 = vmatpush1.msra.mxu0 0.0
      %463 = vmatprep.subr.mxu0 0.0
      %464 = vmatpush1.msra.mxu0 0.0
      %465 = vmatprep.subr.mxu0 0.0
      %466 = vmatpush1.msra.mxu0 0.0
      %467 = vmatprep.subr.mxu0 0.0
      %468 = vmatpush1.msra.mxu0 0.0
      %469 = vmatprep.subr.mxu0 0.0
      %470 = vmatpush1.msra.mxu0 0.0
      %471 = vmatprep.subr.mxu0 0.0
      %472 = vmatpush1.msra.mxu0 0.0
      %473 = vmatprep.subr.mxu0 0.0
      %474 = vmatpush1.msra.mxu0 0.0
      %475 = vmatprep.subr.mxu0 0.0
      %476 = vmatpush1.msra.mxu0 0.0
      %477 = vmatprep.subr.mxu0 0.0
      %478 = vmatpush1.msra.mxu0 0.0
      %479 = vmatprep.subr.mxu0 0.0
      %480 = vmatpush1.msra.mxu0 0.0
      %481 = vmatprep.subr.mxu0 0.0
      %482 = vmatpush1.msra.mxu0 0.0
      %483 = vmatprep.subr.mxu0 0.0
      %484 = vmatpush1.msra.mxu0 0.0
      %485 = vmatprep.subr.mxu0 0.0
      %486 = vmatpush1.msra.mxu0 0.0
      %487 = vmatprep.mubr.f32.mxu0 0.0
      %488 = vmatmul.mubr.f32.gmra.mrb[0].mxu0 %v418
      %v489 = vpop.f32.mrb[0].mxu0
      %v490 = vadd.f32 %v415, %v489
      %v491 = vpop.f32.mrb[0].mxu0
      %492 = vmatprep.mubr.f32.mxu0 0.0
      %493 = vmatmul.mubr.f32.gmra.mrb[0].mxu0 %v421
      %v494 = vpop.f32.mrb[0].mxu0
      %v495 = vadd.f32 %v415, %v494
      %v496 = vpop.f32.mrb[0].mxu0
      %497 = vdwg.mxu0
      %v498 = vld [vmem:[#allocation17] sm:$0xff]
      %v499 = vld [vmem:[#allocation17 + $0x8] sm:$0xff]
      %v500 = vld [vmem:[#allocation17 + $0x10] sm:$0xff]
      %v501 = vld [vmem:[#allocation17 + $0x18] sm:$0xff]
      %v502 = vld [vmem:[#allocation19] sm:$0x1]
      %v504 = vlaneseq
      %v505 = vshrl.u32 %v504, 7
      %v506 = vsub.s32 0, %v505
      %v507 = vrot.slane %v502, %v506
      %vm509 = vcmask 261120
      %v511 = vsel %vm509, %v397, 0
      %v514 = vsel %vm509, %v398, 0
      %516 = vmatprep.subr.mxu0 0.0
      %517 = vmatpush1.msra.mxu0 %v498
      %518 = vmatprep.subr.mxu0 0.0
      %519 = vmatpush1.msra.mxu0 %v499
      %520 = vmatprep.subr.mxu0 0.0
      %521 = vmatpush1.msra.mxu0 %v500
      %522 = vmatprep.subr.mxu0 0.0
      %523 = vmatpush1.msra.mxu0 %v501
      %524 = vmatprep.subr.mxu0 0.0
      %525 = vmatpush1.msra.mxu0 0.0
      %526 = vmatprep.subr.mxu0 0.0
      %527 = vmatpush1.msra.mxu0 0.0
      %528 = vmatprep.subr.mxu0 0.0
      %529 = vmatpush1.msra.mxu0 0.0
      %530 = vmatprep.subr.mxu0 0.0
      %531 = vmatpush1.msra.mxu0 0.0
      %532 = vmatprep.subr.mxu0 0.0
      %533 = vmatpush1.msra.mxu0 0.0
      %534 = vmatprep.subr.mxu0 0.0
      %535 = vmatpush1.msra.mxu0 0.0
      %536 = vmatprep.subr.mxu0 0.0
      %537 = vmatpush1.msra.mxu0 0.0
      %538 = vmatprep.subr.mxu0 0.0
      %539 = vmatpush1.msra.mxu0 0.0
      %540 = vmatprep.subr.mxu0 0.0
      %541 = vmatpush1.msra.mxu0 0.0
      %542 = vmatprep.subr.mxu0 0.0
      %543 = vmatpush1.msra.mxu0 0.0
      %544 = vmatprep.subr.mxu0 0.0
      %545 = vmatpush1.msra.mxu0 0.0
      %546 = vmatprep.subr.mxu0 0.0
      %547 = vmatpush1.msra.mxu0 0.0
      %548 = vmatprep.subr.mxu0 0.0
      %549 = vmatpush1.msra.mxu0 0.0
      %550 = vmatprep.subr.mxu0 0.0
      %551 = vmatpush1.msra.mxu0 0.0
      %552 = vmatprep.subr.mxu0 0.0
      %553 = vmatpush1.msra.mxu0 0.0
      %554 = vmatprep.subr.mxu0 0.0
      %555 = vmatpush1.msra.mxu0 0.0
      %556 = vmatprep.subr.mxu0 0.0
      %557 = vmatpush1.msra.mxu0 0.0
      %558 = vmatprep.subr.mxu0 0.0
      %559 = vmatpush1.msra.mxu0 0.0
      %560 = vmatprep.subr.mxu0 0.0
      %561 = vmatpush1.msra.mxu0 0.0
      %562 = vmatprep.subr.mxu0 0.0
      %563 = vmatpush1.msra.mxu0 0.0
      %564 = vmatprep.subr.mxu0 0.0
      %565 = vmatpush1.msra.mxu0 0.0
      %566 = vmatprep.subr.mxu0 0.0
      %567 = vmatpush1.msra.mxu0 0.0
      %568 = vmatprep.subr.mxu0 0.0
      %569 = vmatpush1.msra.mxu0 0.0
      %570 = vmatprep.subr.mxu0 0.0
      %571 = vmatpush1.msra.mxu0 0.0
      %572 = vmatprep.subr.mxu0 0.0
      %573 = vmatpush1.msra.mxu0 0.0
      %574 = vmatprep.subr.mxu0 0.0
      %575 = vmatpush1.msra.mxu0 0.0
      %576 = vmatprep.subr.mxu0 0.0
      %577 = vmatpush1.msra.mxu0 0.0
      %578 = vmatprep.subr.mxu0 0.0
      %579 = vmatpush1.msra.mxu0 0.0
      %580 = vmatprep.mubr.f32.mxu0 0.0
      %581 = vmatmul.mubr.f32.gmra.mrb[0].mxu0 %v511
      %v582 = vpop.f32.mrb[0].mxu0
      %v583 = vadd.f32 %v507, %v582
      %v584 = vpop.f32.mrb[0].mxu0
      %585 = vmatprep.mubr.f32.mxu0 0.0
      %586 = vmatmul.mubr.f32.gmra.mrb[0].mxu0 %v514
      %v587 = vpop.f32.mrb[0].mxu0
      %v588 = vadd.f32 %v507, %v587
      %v589 = vpop.f32.mrb[0].mxu0
      %590 = vdwg.mxu0
      %v591 = vadd.f32 %v490, %v583
      %v592 = vadd.f32 %v495, %v588
      %v593 = vxor.u32 %v591, 2147483648
      %v594 = vxor.u32 %v592, 2147483648
      %v595 = vmul.f32 %v593, 1.442695
      %v596 = vpow.pop %v595
      %v597 = vmul.f32 %v594, 1.442695
      %v598 = vpow.pop %v597
      %v599 = vadd.f32 %v596, 1.0
      %v600 = vadd.f32 %v598, 1.0
      %v601 = vrcp.pop %v599
      %v602 = vmul.f32 1.0, %v601
      %v603 = vrcp.pop %v600
      %v604 = vmul.f32 1.0, %v603
      %s605 = scalar_lea.vmem [#allocation14], 88
      %v606 = vld [vmem:[%s605] sm:$0xff]
      %v607 = vld [vmem:[%s605 + $0x8] sm:$0xff]
      %v608 = vld [vmem:[%s605 + $0x10] sm:$0xff]
      %v609 = vld [vmem:[%s605 + $0x18] sm:$0xff]
      %v610 = vld [vmem:[%s605 + $0x20] sm:$0xff]
      %v611 = vld [vmem:[%s605 + $0x28] sm:$0xff]
      %v612 = vld [vmem:[%s605 + $0x30] sm:$0xff]
      %v613 = vld [vmem:[%s605 + $0x38] sm:$0xff]
      %v614 = vld [vmem:[%s605 + $0x40] sm:$0xff]
      %v615 = vld [vmem:[%s605 + $0x48] sm:$0xff]
      %v616 = vld [vmem:[%s605 + $0x50] sm:$0xff]
      %s617 = scalar_lea.vmem [#allocation16], 1
      %v618 = vld [vmem:[%s617] sm:$0x1]
      %v620 = vlaneseq
      %v621 = vshrl.u32 %v620, 7
      %v622 = vsub.s32 0, %v621
      %v623 = vrot.slane %v618, %v622
      %625 = vmatprep.subr.mxu0 0.0
      %626 = vmatpush1.msra.mxu0 %v606
      %627 = vmatprep.subr.mxu0 0.0
      %628 = vmatpush1.msra.mxu0 %v607
      %629 = vmatprep.subr.mxu0 0.0
      %630 = vmatpush1.msra.mxu0 %v608
      %631 = vmatprep.subr.mxu0 0.0
      %632 = vmatpush1.msra.mxu0 %v609
      %633 = vmatprep.subr.mxu0 0.0
      %634 = vmatpush1.msra.mxu0 %v610
      %635 = vmatprep.subr.mxu0 0.0
      %636 = vmatpush1.msra.mxu0 %v611
      %637 = vmatprep.subr.mxu0 0.0
      %638 = vmatpush1.msra.mxu0 %v612
      %639 = vmatprep.subr.mxu0 0.0
      %640 = vmatpush1.msra.mxu0 %v613
      %641 = vmatprep.subr.mxu0 0.0
      %642 = vmatpush1.msra.mxu0 %v614
      %643 = vmatprep.subr.mxu0 0.0
      %644 = vmatpush1.msra.mxu0 %v615
      %645 = vmatprep.subr.mxu0 0.0
      %646 = vmatpush1.msra.mxu0 %v616
      %647 = vmatprep.subr.mxu0 0.0
      %648 = vmatpush1.msra.mxu0 0.0
      %649 = vmatprep.subr.mxu0 0.0
      %650 = vmatpush1.msra.mxu0 0.0
      %651 = vmatprep.subr.mxu0 0.0
      %652 = vmatpush1.msra.mxu0 0.0
      %653 = vmatprep.subr.mxu0 0.0
      %654 = vmatpush1.msra.mxu0 0.0
      %655 = vmatprep.subr.mxu0 0.0
      %656 = vmatpush1.msra.mxu0 0.0
      %657 = vmatprep.subr.mxu0 0.0
      %658 = vmatpush1.msra.mxu0 0.0
      %659 = vmatprep.subr.mxu0 0.0
      %660 = vmatpush1.msra.mxu0 0.0
      %661 = vmatprep.subr.mxu0 0.0
      %662 = vmatpush1.msra.mxu0 0.0
      %663 = vmatprep.subr.mxu0 0.0
      %664 = vmatpush1.msra.mxu0 0.0
      %665 = vmatprep.subr.mxu0 0.0
      %666 = vmatpush1.msra.mxu0 0.0
      %667 = vmatprep.subr.mxu0 0.0
      %668 = vmatpush1.msra.mxu0 0.0
      %669 = vmatprep.subr.mxu0 0.0
      %670 = vmatpush1.msra.mxu0 0.0
      %671 = vmatprep.subr.mxu0 0.0
      %672 = vmatpush1.msra.mxu0 0.0
      %673 = vmatprep.subr.mxu0 0.0
      %674 = vmatpush1.msra.mxu0 0.0
      %675 = vmatprep.subr.mxu0 0.0
      %676 = vmatpush1.msra.mxu0 0.0
      %677 = vmatprep.subr.mxu0 0.0
      %678 = vmatpush1.msra.mxu0 0.0
      %679 = vmatprep.subr.mxu0 0.0
      %680 = vmatpush1.msra.mxu0 0.0
      %681 = vmatprep.subr.mxu0 0.0
      %682 = vmatpush1.msra.mxu0 0.0
      %683 = vmatprep.subr.mxu0 0.0
      %684 = vmatpush1.msra.mxu0 0.0
      %685 = vmatprep.subr.mxu0 0.0
      %686 = vmatpush1.msra.mxu0 0.0
      %687 = vmatprep.subr.mxu0 0.0
      %688 = vmatpush1.msra.mxu0 0.0
      %689 = vmatprep.mubr.f32.mxu0 0.0
      %690 = vmatmul.mubr.f32.gmra.mrb[0].mxu0 %v418
      %v691 = vpop.f32.mrb[0].mxu0
      %v692 = vadd.f32 %v623, %v691
      %v693 = vpop.f32.mrb[0].mxu0
      %694 = vmatprep.mubr.f32.mxu0 0.0
      %695 = vmatmul.mubr.f32.gmra.mrb[0].mxu0 %v421
      %v696 = vpop.f32.mrb[0].mxu0
      %v697 = vadd.f32 %v623, %v696
      %v698 = vpop.f32.mrb[0].mxu0
      %699 = vdwg.mxu0
      %s700 = scalar_lea.vmem [#allocation17], 32
      %v701 = vld [vmem:[%s700] sm:$0xff]
      %v702 = vld [vmem:[%s700 + $0x8] sm:$0xff]
      %v703 = vld [vmem:[%s700 + $0x10] sm:$0xff]
      %v704 = vld [vmem:[%s700 + $0x18] sm:$0xff]
      %s705 = scalar_lea.vmem [#allocation19], 1
      %v706 = vld [vmem:[%s705] sm:$0x1]
      %v708 = vlaneseq
      %v709 = vshrl.u32 %v708, 7
      %v710 = vsub.s32 0, %v709
      %v711 = vrot.slane %v706, %v710
      %713 = vmatprep.subr.mxu0 0.0
      %714 = vmatpush1.msra.mxu0 %v701
      %715 = vmatprep.subr.mxu0 0.0
      %716 = vmatpush1.msra.mxu0 %v702
      %717 = vmatprep.subr.mxu0 0.0
      %718 = vmatpush1.msra.mxu0 %v703
      %719 = vmatprep.subr.mxu0 0.0
      %720 = vmatpush1.msra.mxu0 %v704
      %721 = vmatprep.subr.mxu0 0.0
      %722 = vmatpush1.msra.mxu0 0.0
      %723 = vmatprep.subr.mxu0 0.0
      %724 = vmatpush1.msra.mxu0 0.0
      %725 = vmatprep.subr.mxu0 0.0
      %726 = vmatpush1.msra.mxu0 0.0
      %727 = vmatprep.subr.mxu0 0.0
      %728 = vmatpush1.msra.mxu0 0.0
      %729 = vmatprep.subr.mxu0 0.0
      %730 = vmatpush1.msra.mxu0 0.0
      %731 = vmatprep.subr.mxu0 0.0
      %732 = vmatpush1.msra.mxu0 0.0
      %733 = vmatprep.subr.mxu0 0.0
      %734 = vmatpush1.msra.mxu0 0.0
      %735 = vmatprep.subr.mxu0 0.0
      %736 = vmatpush1.msra.mxu0 0.0
      %737 = vmatprep.subr.mxu0 0.0
      %738 = vmatpush1.msra.mxu0 0.0
      %739 = vmatprep.subr.mxu0 0.0
      %740 = vmatpush1.msra.mxu0 0.0
      %741 = vmatprep.subr.mxu0 0.0
      %742 = vmatpush1.msra.mxu0 0.0
      %743 = vmatprep.subr.mxu0 0.0
      %744 = vmatpush1.msra.mxu0 0.0
      %745 = vmatprep.subr.mxu0 0.0
      %746 = vmatpush1.msra.mxu0 0.0
      %747 = vmatprep.subr.mxu0 0.0
      %748 = vmatpush1.msra.mxu0 0.0
      %749 = vmatprep.subr.mxu0 0.0
      %750 = vmatpush1.msra.mxu0 0.0
      %751 = vmatprep.subr.mxu0 0.0
      %752 = vmatpush1.msra.mxu0 0.0
      %753 = vmatprep.subr.mxu0 0.0
      %754 = vmatpush1.msra.mxu0 0.0
      %755 = vmatprep.subr.mxu0 0.0
      %756 = vmatpush1.msra.mxu0 0.0
      %757 = vmatprep.subr.mxu0 0.0
      %758 = vmatpush1.msra.mxu0 0.0
      %759 = vmatprep.subr.mxu0 0.0
      %760 = vmatpush1.msra.mxu0 0.0
      %761 = vmatprep.subr.mxu0 0.0
      %762 = vmatpush1.msra.mxu0 0.0
      %763 = vmatprep.subr.mxu0 0.0
      %764 = vmatpush1.msra.mxu0 0.0
      %765 = vmatprep.subr.mxu0 0.0
      %766 = vmatpush1.msra.mxu0 0.0
      %767 = vmatprep.subr.mxu0 0.0
      %768 = vmatpush1.msra.mxu0 0.0
      %769 = vmatprep.subr.mxu0 0.0
      %770 = vmatpush1.msra.mxu0 0.0
      %771 = vmatprep.subr.mxu0 0.0
      %772 = vmatpush1.msra.mxu0 0.0
      %773 = vmatprep.subr.mxu0 0.0
      %774 = vmatpush1.msra.mxu0 0.0
      %775 = vmatprep.subr.mxu0 0.0
      %776 = vmatpush1.msra.mxu0 0.0
      %777 = vmatprep.mubr.f32.mxu0 0.0
      %778 = vmatmul.mubr.f32.gmra.mrb[0].mxu0 %v511
      %v779 = vpop.f32.mrb[0].mxu0
      %v780 = vadd.f32 %v711, %v779
      %v781 = vpop.f32.mrb[0].mxu0
      %782 = vmatprep.mubr.f32.mxu0 0.0
      %783 = vmatmul.mubr.f32.gmra.mrb[0].mxu0 %v514
      %v784 = vpop.f32.mrb[0].mxu0
      %v785 = vadd.f32 %v711, %v784
      %v786 = vpop.f32.mrb[0].mxu0
      %787 = vdwg.mxu0
      %v788 = vadd.f32 %v692, %v780
      %v789 = vadd.f32 %v697, %v785
      %v790 = vxor.u32 %v788, 2147483648
      %v791 = vxor.u32 %v789, 2147483648
      %v792 = vmul.f32 %v790, 1.442695
      %v793 = vpow.pop %v792
      %v794 = vmul.f32 %v791, 1.442695
      %v795 = vpow.pop %v794
      %v796 = vadd.f32 %v793, 1.0
      %v797 = vadd.f32 %v795, 1.0
      %v798 = vrcp.pop %v796
      %v799 = vmul.f32 1.0, %v798
      %v800 = vrcp.pop %v797
      %v801 = vmul.f32 1.0, %v800
      %s802 = scalar_lea.vmem [#allocation14], 176
      %v803 = vld [vmem:[%s802] sm:$0xff]
      %v804 = vld [vmem:[%s802 + $0x8] sm:$0xff]
      %v805 = vld [vmem:[%s802 + $0x10] sm:$0xff]
      %v806 = vld [vmem:[%s802 + $0x18] sm:$0xff]
      %v807 = vld [vmem:[%s802 + $0x20] sm:$0xff]
      %v808 = vld [vmem:[%s802 + $0x28] sm:$0xff]
      %v809 = vld [vmem:[%s802 + $0x30] sm:$0xff]
      %v810 = vld [vmem:[%s802 + $0x38] sm:$0xff]
      %v811 = vld [vmem:[%s802 + $0x40] sm:$0xff]
      %v812 = vld [vmem:[%s802 + $0x48] sm:$0xff]
      %v813 = vld [vmem:[%s802 + $0x50] sm:$0xff]
      %s814 = scalar_lea.vmem [#allocation16], 2
      %v815 = vld [vmem:[%s814] sm:$0x1]
      %v817 = vlaneseq
      %v818 = vshrl.u32 %v817, 7
      %v819 = vsub.s32 0, %v818
      %v820 = vrot.slane %v815, %v819
      %822 = vmatprep.subr.mxu0 0.0
      %823 = vmatpush1.msra.mxu0 %v803
      %824 = vmatprep.subr.mxu0 0.0
      %825 = vmatpush1.msra.mxu0 %v804
      %826 = vmatprep.subr.mxu0 0.0
      %827 = vmatpush1.msra.mxu0 %v805
      %828 = vmatprep.subr.mxu0 0.0
      %829 = vmatpush1.msra.mxu0 %v806
      %830 = vmatprep.subr.mxu0 0.0
      %831 = vmatpush1.msra.mxu0 %v807
      %832 = vmatprep.subr.mxu0 0.0
      %833 = vmatpush1.msra.mxu0 %v808
      %834 = vmatprep.subr.mxu0 0.0
      %835 = vmatpush1.msra.mxu0 %v809
      %836 = vmatprep.subr.mxu0 0.0
      %837 = vmatpush1.msra.mxu0 %v810
      %838 = vmatprep.subr.mxu0 0.0
      %839 = vmatpush1.msra.mxu0 %v811
      %840 = vmatprep.subr.mxu0 0.0
      %841 = vmatpush1.msra.mxu0 %v812
      %842 = vmatprep.subr.mxu0 0.0
      %843 = vmatpush1.msra.mxu0 %v813
      %844 = vmatprep.subr.mxu0 0.0
      %845 = vmatpush1.msra.mxu0 0.0
      %846 = vmatprep.subr.mxu0 0.0
      %847 = vmatpush1.msra.mxu0 0.0
      %848 = vmatprep.subr.mxu0 0.0
      %849 = vmatpush1.msra.mxu0 0.0
      %850 = vmatprep.subr.mxu0 0.0
      %851 = vmatpush1.msra.mxu0 0.0
      %852 = vmatprep.subr.mxu0 0.0
      %853 = vmatpush1.msra.mxu0 0.0
      %854 = vmatprep.subr.mxu0 0.0
      %855 = vmatpush1.msra.mxu0 0.0
      %856 = vmatprep.subr.mxu0 0.0
      %857 = vmatpush1.msra.mxu0 0.0
      %858 = vmatprep.subr.mxu0 0.0
      %859 = vmatpush1.msra.mxu0 0.0
      %860 = vmatprep.subr.mxu0 0.0
      %861 = vmatpush1.msra.mxu0 0.0
      %862 = vmatprep.subr.mxu0 0.0
      %863 = vmatpush1.msra.mxu0 0.0
      %864 = vmatprep.subr.mxu0 0.0
      %865 = vmatpush1.msra.mxu0 0.0
      %866 = vmatprep.subr.mxu0 0.0
      %867 = vmatpush1.msra.mxu0 0.0
      %868 = vmatprep.subr.mxu0 0.0
      %869 = vmatpush1.msra.mxu0 0.0
      %870 = vmatprep.subr.mxu0 0.0
      %871 = vmatpush1.msra.mxu0 0.0
      %872 = vmatprep.subr.mxu0 0.0
      %873 = vmatpush1.msra.mxu0 0.0
      %874 = vmatprep.subr.mxu0 0.0
      %875 = vmatpush1.msra.mxu0 0.0
      %876 = vmatprep.subr.mxu0 0.0
      %877 = vmatpush1.msra.mxu0 0.0
      %878 = vmatprep.subr.mxu0 0.0
      %879 = vmatpush1.msra.mxu0 0.0
      %880 = vmatprep.subr.mxu0 0.0
      %881 = vmatpush1.msra.mxu0 0.0
      %882 = vmatprep.subr.mxu0 0.0
      %883 = vmatpush1.msra.mxu0 0.0
      %884 = vmatprep.subr.mxu0 0.0
      %885 = vmatpush1.msra.mxu0 0.0
      %886 = vmatprep.mubr.f32.mxu0 0.0
      %887 = vmatmul.mubr.f32.gmra.mrb[0].mxu0 %v418
      %v888 = vpop.f32.mrb[0].mxu0
      %v889 = vadd.f32 %v820, %v888
      %v890 = vpop.f32.mrb[0].mxu0
      %891 = vmatprep.mubr.f32.mxu0 0.0
      %892 = vmatmul.mubr.f32.gmra.mrb[0].mxu0 %v421
      %v893 = vpop.f32.mrb[0].mxu0
      %v894 = vadd.f32 %v820, %v893
      %v895 = vpop.f32.mrb[0].mxu0
      %896 = vdwg.mxu0
      %s897 = scalar_lea.vmem [#allocation17], 64
      %v898 = vld [vmem:[%s897] sm:$0xff]
      %v899 = vld [vmem:[%s897 + $0x8] sm:$0xff]
      %v900 = vld [vmem:[%s897 + $0x10] sm:$0xff]
      %v901 = vld [vmem:[%s897 + $0x18] sm:$0xff]
      %s902 = scalar_lea.vmem [#allocation19], 2
      %v903 = vld [vmem:[%s902] sm:$0x1]
      %v905 = vlaneseq
      %v906 = vshrl.u32 %v905, 7
      %v907 = vsub.s32 0, %v906
      %v908 = vrot.slane %v903, %v907
      %910 = vmatprep.subr.mxu0 0.0
      %911 = vmatpush1.msra.mxu0 %v898
      %912 = vmatprep.subr.mxu0 0.0
      %913 = vmatpush1.msra.mxu0 %v899
      %914 = vmatprep.subr.mxu0 0.0
      %915 = vmatpush1.msra.mxu0 %v900
      %916 = vmatprep.subr.mxu0 0.0
      %917 = vmatpush1.msra.mxu0 %v901
      %918 = vmatprep.subr.mxu0 0.0
      %919 = vmatpush1.msra.mxu0 0.0
      %920 = vmatprep.subr.mxu0 0.0
      %921 = vmatpush1.msra.mxu0 0.0
      %922 = vmatprep.subr.mxu0 0.0
      %923 = vmatpush1.msra.mxu0 0.0
      %924 = vmatprep.subr.mxu0 0.0
      %925 = vmatpush1.msra.mxu0 0.0
      %926 = vmatprep.subr.mxu0 0.0
      %927 = vmatpush1.msra.mxu0 0.0
      %928 = vmatprep.subr.mxu0 0.0
      %929 = vmatpush1.msra.mxu0 0.0
      %930 = vmatprep.subr.mxu0 0.0
      %931 = vmatpush1.msra.mxu0 0.0
      %932 = vmatprep.subr.mxu0 0.0
      %933 = vmatpush1.msra.mxu0 0.0
      %934 = vmatprep.subr.mxu0 0.0
      %935 = vmatpush1.msra.mxu0 0.0
      %936 = vmatprep.subr.mxu0 0.0
      %937 = vmatpush1.msra.mxu0 0.0
      %938 = vmatprep.subr.mxu0 0.0
      %939 = vmatpush1.msra.mxu0 0.0
      %940 = vmatprep.subr.mxu0 0.0
      %941 = vmatpush1.msra.mxu0 0.0
      %942 = vmatprep.subr.mxu0 0.0
      %943 = vmatpush1.msra.mxu0 0.0
      %944 = vmatprep.subr.mxu0 0.0
      %945 = vmatpush1.msra.mxu0 0.0
      %946 = vmatprep.subr.mxu0 0.0
      %947 = vmatpush1.msra.mxu0 0.0
      %948 = vmatprep.subr.mxu0 0.0
      %949 = vmatpush1.msra.mxu0 0.0
      %950 = vmatprep.subr.mxu0 0.0
      %951 = vmatpush1.msra.mxu0 0.0
      %952 = vmatprep.subr.mxu0 0.0
      %953 = vmatpush1.msra.mxu0 0.0
      %954 = vmatprep.subr.mxu0 0.0
      %955 = vmatpush1.msra.mxu0 0.0
      %956 = vmatprep.subr.mxu0 0.0
      %957 = vmatpush1.msra.mxu0 0.0
      %958 = vmatprep.subr.mxu0 0.0
      %959 = vmatpush1.msra.mxu0 0.0
      %960 = vmatprep.subr.mxu0 0.0
      %961 = vmatpush1.msra.mxu0 0.0
      %962 = vmatprep.subr.mxu0 0.0
      %963 = vmatpush1.msra.mxu0 0.0
      %964 = vmatprep.subr.mxu0 0.0
      %965 = vmatpush1.msra.mxu0 0.0
      %966 = vmatprep.subr.mxu0 0.0
      %967 = vmatpush1.msra.mxu0 0.0
      %968 = vmatprep.subr.mxu0 0.0
      %969 = vmatpush1.msra.mxu0 0.0
      %970 = vmatprep.subr.mxu0 0.0
      %971 = vmatpush1.msra.mxu0 0.0
      %972 = vmatprep.subr.mxu0 0.0
      %973 = vmatpush1.msra.mxu0 0.0
      %974 = vmatprep.mubr.f32.mxu0 0.0
      %975 = vmatmul.mubr.f32.gmra.mrb[0].mxu0 %v511
      %v976 = vpop.f32.mrb[0].mxu0
      %v977 = vadd.f32 %v908, %v976
      %v978 = vpop.f32.mrb[0].mxu0
      %979 = vmatprep.mubr.f32.mxu0 0.0
      %980 = vmatmul.mubr.f32.gmra.mrb[0].mxu0 %v514
      %v981 = vpop.f32.mrb[0].mxu0
      %v982 = vadd.f32 %v908, %v981
      %v983 = vpop.f32.mrb[0].mxu0
      %984 = vdwg.mxu0
      %v985 = vmul.f32 %v602, %v977
      %v986 = vmul.f32 %v604, %v982
      %v987 = vadd.f32 %v889, %v985
      %v988 = vadd.f32 %v894, %v986
      %v989 = vtanh.pop %v987
      %v990 = vtanh.pop %v988
      %v991 = vsub.f32 1.0, %v799
      %v992 = vsub.f32 1.0, %v801
      %v993 = vmul.f32 %v991, %v989
      %v994 = vmul.f32 %v992, %v990
      %v995 = vmul.f32 %v799, %v397
      %v996 = vmul.f32 %v801, %v398
      %v997 = vadd.f32 %v993, %v995
      %v998 = vadd.f32 %v994, %v996
      %999 = vst.msk [vmem:[#allocation20] sm:$0xff] %vm509, %v997
      %1000 = vst.msk [vmem:[#allocation20 + $0x8] sm:$0xff] %vm509, %v998
      %vm1001 = vcmp.gt.f32.partialorder %v377, 0.0
      %vm1002 = vcmp.gt.f32.partialorder %v378, 0.0
      %v1003 = vld [vmem:[#allocation4] sm:$0xff]
      %v1004 = vld [vmem:[#allocation4 + $0x8] sm:$0xff]
      %v1005 = vld [vmem:[#allocation8] sm:$0xff]
      %v1006 = vld [vmem:[#allocation8 + $0x8] sm:$0xff]
      %v1007 = vsel %vm1001, %v1003, %v1005
      %v1008 = vsel %vm1002, %v1004, %v1006
      %1009 = vst.msk [vmem:[#allocation21] sm:$0xff] %vm318, %v1007
      %1010 = vst.msk [vmem:[#allocation21 + $0x8] sm:$0xff] %vm318, %v1008
    $region81: #{tpu_custom_call.1} parent=1 // pred_fallthru
      _
    // Predicated region
    $region82: #{tpu_custom_call.1} parent=1 // pred_check
      _
    $region83: #{tpu_custom_call.1} parent=1 // pred_check_branch
      %1012 = sbr.rel (0) target = $region85
    $region84: #{tpu_custom_call.1} parent=1 // pred_region
      %s1014 = ssub.s32 256, 256
      %1015 = vsyncadd [#allocation7], %s1014
      %s1016 = sshll.u32 [#allocation20], 4
      %s1017 = int_to_ptr.vmem [resolvable:$true] %s1016
      %1022 = dma.vmem_to_hbm [thread:$0]  %s1017, 256, %s9, [#allocation7], 128, 128, 8
    $region85: #{tpu_custom_call.1} parent=1 // pred_fallthru
      _
    // Predicated region
    $region86: #{tpu_custom_call.1} parent=1 // pred_check
      _
    $region87: #{tpu_custom_call.1} parent=1 // pred_check_branch
      %1024 = sbr.rel (0) target = $region89
    $region88: #{tpu_custom_call.1} parent=1 // pred_region
      %s1026 = ssub.s32 256, 256
      %1027 = vsyncadd [#allocation22], %s1026
      %s1028 = sshll.u32 [#allocation21], 4
      %s1029 = int_to_ptr.vmem [resolvable:$true] %s1028
      %1034 = dma.vmem_to_hbm [thread:$0]  %s1029, 256, %s10, [#allocation22], 128, 128, 8
    $region89: #{tpu_custom_call.1} parent=1 // pred_fallthru
      _
    // Predicated region
    $region90: #{tpu_custom_call.1} parent=1 // pred_check
      _
    $region91: #{tpu_custom_call.1} parent=1 // pred_check_branch
      %1036 = sbr.rel (0) target = $region93
    $region92: #{tpu_custom_call.1} parent=1 // pred_region
      %1037 = dma.done [#allocation7], 256
    $region93: #{tpu_custom_call.1} parent=1 // pred_fallthru
      _
    // Predicated region
    $region94: #{tpu_custom_call.1} parent=1 // pred_check
      _
    $region95: #{tpu_custom_call.1} parent=1 // pred_check_branch
      %1039 = sbr.rel (0) target = $region97
    $region96: #{tpu_custom_call.1} parent=1 // pred_region
      %1040 = dma.done [#allocation22], 256
    $region97: #{tpu_custom_call.1} parent=1 // pred_fallthru
      _
    %1041 = vsyncpa [#allocation6], 1
    %1042 = vsyncpa [#allocation9], 1
    %1043 = vsyncpa [#allocation12], 1
    %1044 = vsyncpa [#allocation15], 1
    %1045 = vsyncpa [#allocation18], 1
    %1046 = vsyncpa [#allocation7], 1
    %1047 = vsyncpa [#allocation22], 1

</llo_original>
